<compile_context>
chip_gen: v6e
topology: v6e:2x2x1
jax: 0.10.0
libtpu: 0.0.40
codegen_flags: <defaults>
</compile_context>

<pallas_src>
import functools

import jax
import jax.numpy as jnp
from jax.experimental import pallas as pl
from jax.experimental.pallas import tpu as pltpu


def _mha_kernel(x_ref, wqkv_ref, wo_ref, bo_ref, out_ref, *, nhead):
    # x_ref   : (bB, S, D)      packed batch block (f32)
    # wqkv_ref: (D, 3*H*D)      fused [Wq^T * d^-0.5 | Wk^T | Wv^T]  (bf16)
    # wo_ref  : (H*D, D)        Wo^T (bf16)
    # bo_ref  : (1, D)          output bias (f32)
    # out_ref : (bB, S, D)
    bB, S, D = x_ref.shape
    HD = nhead * D

    xf = x_ref[...].reshape(bB * S, D).astype(jnp.bfloat16)

    # Fused QKV projection; the Q columns already carry the combined d**-0.5 scale.
    qkv = jnp.dot(xf, wqkv_ref[...], preferred_element_type=jnp.float32)  # (bB*S, 3*HD)
    wo = wo_ref[...]                                                      # (HD, D) bf16

    acc = jnp.zeros((bB * S, D), jnp.float32)
    # Static head loop: nhead is a small compile-time constant and D % 128 == 0,
    # so every slice below is lane-aligned (no relayout copies).
    # TODO(synk): for large nhead / long S, convert to lax.fori_loop(unroll=True)
    # over a VMEM-scratch qkv ref (ref slices) and add flash-style q/k tiling so
    # live ranges and the (S, S) score matrix stay bounded (needed first on v7x's
    # 64 MiB VMEM).
    for h in range(nhead):
        lo = h * D
        qh = qkv[:, lo:lo + D].reshape(bB, S, D).astype(jnp.bfloat16)
        kh = qkv[:, HD + lo:HD + lo + D].reshape(bB, S, D).astype(jnp.bfloat16)
        vh = qkv[:, 2 * HD + lo:2 * HD + lo + D].reshape(bB, S, D).astype(jnp.bfloat16)

        # Per-batch-element scores for this head: (bB, S, S), f32 on the MXU.
        s = jnp.einsum('bqd,bkd->bqk', qh, kh, preferred_element_type=jnp.float32)
        s = s - jnp.max(s, axis=-1, keepdims=True)
        p = jnp.exp(s)
        inv_l = pl.reciprocal(jnp.sum(p, axis=-1, keepdims=True), approx=True)

        oh = jnp.einsum('bqk,bkd->bqd', p.astype(jnp.bfloat16), vh,
                        preferred_element_type=jnp.float32)               # (bB, S, D)
        oh = oh * inv_l                                                    # normalize post-PV

        # Fold this head's slice of the output projection into the accumulator.
        acc = acc + jnp.dot(oh.reshape(bB * S, D).astype(jnp.bfloat16),
                            wo[lo:lo + D, :],
                            preferred_element_type=jnp.float32)

    out = acc + bo_ref[...]                                                # (bB*S, D)
    out_ref[...] = out.reshape(bB, S, D).astype(out_ref.dtype)


def prepare_mha_params(wq, wk, wv, wo, bo, *, compute_dtype=jnp.bfloat16):
    """One-time parameter prep (kept out of the per-call path).

    wq/wk/wv: (nhead*D, D) torch nn.Linear layout; wo: (D, nhead*D); bo: (D,).
    Returns (wqkv_t, wo_t, bo2) ready for multihead_attn_forward:
      wqkv_t = [Wq^T * d^-0.5 | Wk^T | Wv^T]  (D, 3*nhead*D), bf16
      wo_t   = Wo^T                            (nhead*D, D),   bf16
      bo2    = bias                            (1, D),         f32
    """
    HD, D = wq.shape
    scale = jnp.float32(D) ** -0.5            # (d**-0.25 on q) * (d**-0.25 on k)
    wqkv_t = jnp.concatenate(
        [wq.T.astype(jnp.float32) * scale, wk.T.astype(jnp.float32),
         wv.T.astype(jnp.float32)], axis=1).astype(compute_dtype)          # (D, 3*HD)
    wo_t = wo.T.astype(compute_dtype)                                      # (HD, D)
    bo2 = bo.reshape(1, D).astype(jnp.float32)
    return wqkv_t, wo_t, bo2


def _pick_batch_block(B, S, target_rows=256, max_rows=1024):
    """Largest divisor of B whose packed row count stays <= max_rows; stop once
    bB*S reaches target_rows (enough to fill MXU rows and make >=512 KB DMAs)."""
    best = 1
    for cand in range(1, B + 1):
        if B % cand != 0 or cand * S > max_rows:
            continue
        best = cand
        if cand * S >= target_rows:
            break
    return best


def multihead_attn_forward(x, wqkv_t, wo_t, bo2, *, nhead):
    """x: (B, S, D); prepared params from prepare_mha_params -> (B, S, D)."""
    B, S, D = x.shape
    HD = nhead * D
    assert D % 128 == 0, "head dim must be a lane-width multiple (128)"
    assert wqkv_t.shape == (D, 3 * HD)
    assert wo_t.shape == (HD, D)
    assert bo2.shape == (1, D)

    bB = _pick_batch_block(B, S)
    kernel = functools.partial(_mha_kernel, nhead=nhead)

    flops = (2 * B * S * D * 3 * HD            # fused QKV projection
             + 4 * B * nhead * S * S * D        # scores + PV
             + 2 * B * S * HD * D)              # output projection
    transcendentals = B * nhead * S * S
    bytes_accessed = (4 * 2 * B * S * D         # x in + out (f32)
                      + 2 * (3 * D * HD + HD * D)   # bf16 weights
                      + 4 * D)                  # bias

    return pl.pallas_call(
        kernel,
        out_shape=jax.ShapeDtypeStruct((B, S, D), x.dtype),
        grid_spec=pltpu.PrefetchScalarGridSpec(
            num_scalar_prefetch=0,
            grid=(B // bB,),
            in_specs=[
                pl.BlockSpec((bB, S, D), lambda b: (b, 0, 0)),   # packed x block
                # Constant-index weights: DMA'd into VMEM once, revisited each step.
                # TODO(synk): single-buffer these (pipeline_mode=pl.Buffered(1)) once
                # H*D grows enough that the redundant second buffer matters for VMEM.
                pl.BlockSpec((D, 3 * HD), lambda b: (0, 0)),     # fused Wqkv^T (bf16)
                pl.BlockSpec((HD, D), lambda b: (0, 0)),         # Wo^T (bf16)
                pl.BlockSpec((1, D), lambda b: (0, 0)),          # bias (f32)
            ],
            out_specs=pl.BlockSpec((bB, S, D), lambda b: (b, 0, 0)),
        ),
        compiler_params=pltpu.CompilerParams(
            # TODO(synk): for small-batch serving on v7x (2 TensorCores), add a
            # second "parallel" grid axis over query tiles so both cores get work.
            dimension_semantics=("parallel",),
            vmem_limit_bytes=64 * 1024 * 1024,
        ),
        cost_estimate=pl.CostEstimate(
            flops=flops,
            transcendentals=transcendentals,
            bytes_accessed=bytes_accessed,
        ),
    )(x, wqkv_t, wo_t, bo2)


def _mha_reference(x, wq, wk, wv, wo, bo, *, nhead):
    """Pure-JAX f32 mirror of the PyTorch forward."""
    B, S, D = x.shape
    q = jnp.einsum('bsd,fd->bsf', x, wq)
    k = jnp.einsum('bsd,fd->bsf', x, wk)
    v = jnp.einsum('bsd,fd->bsf', x, wv)

    def split(t):
        return t.reshape(B, S, nhead, D).transpose(0, 2, 1, 3).reshape(B * nhead, S, D)

    q = split(q) / D ** 0.25
    k = split(k) / D ** 0.25
    v = split(v)
    attn = jax.nn.softmax(jnp.einsum('bqd,bkd->bqk', q, k), axis=-1)
    out = jnp.einsum('bqk,bkd->bqd', attn, v)
    out = out.reshape(B, nhead, S, D).transpose(0, 2, 1, 3).reshape(B, S, nhead * D)
    return jnp.einsum('bsf,df->bsd', out, wo) + bo


if __name__ == "__main__":
    # Small, deterministic shapes; D is a lane-width multiple (128).
    B, S, D, H = 2, 8, 128, 4
    HD = D * H

    key = jax.random.PRNGKey(0)
    ks = jax.random.split(key, 6)
    x = jax.random.normal(ks[0], (B, S, D), dtype=jnp.float32)
    wq = jax.random.normal(ks[1], (HD, D), dtype=jnp.float32) / jnp.sqrt(D)
    wk = jax.random.normal(ks[2], (HD, D), dtype=jnp.float32) / jnp.sqrt(D)
    wv = jax.random.normal(ks[3], (HD, D), dtype=jnp.float32) / jnp.sqrt(D)
    wo = jax.random.normal(ks[4], (D, HD), dtype=jnp.float32) / jnp.sqrt(HD)
    bo = jax.random.normal(ks[5], (D,), dtype=jnp.float32) * 0.01

    # One-time parameter prep (transpose / fuse / scale-fold / bf16 cast).
    wqkv_t, wo_t, bo2 = prepare_mha_params(wq, wk, wv, wo, bo)

    out = multihead_attn_forward(x, wqkv_t, wo_t, bo2, nhead=H)
    out = jax.block_until_ready(out)

    ref = _mha_reference(x, wq, wk, wv, wo, bo, nhead=H)
    assert out.shape == (B, S, D)
    max_err = float(jnp.max(jnp.abs(out - ref)))
    # bf16 matmul operands with f32 accumulation vs the pure-f32 reference.
    assert jnp.allclose(out, ref, atol=5e-2, rtol=5e-2), f"max abs err {max_err}"

    print("KERNEL_OK")
</pallas_src>

<mosaic_0001>
module attributes {stable_mosaic.version = 11 : i64} {
  func.func @_mha_kernel(%arg0: i32, %arg1: memref<2x8x128xf32, #tpu.memory_space<vmem>>, %arg2: memref<128x1536xbf16, #tpu.memory_space<vmem>>, %arg3: memref<512x128xbf16, #tpu.memory_space<vmem>>, %arg4: memref<1x128xf32, #tpu.memory_space<vmem>>, %arg5: memref<2x8x128xf32, #tpu.memory_space<vmem>>) attributes {dimension_semantics = [#tpu.dimension_semantics<parallel>], iteration_bounds = array<i64: 1>, scalar_prefetch = 0 : i64, scratch_operands = 0 : i64, tpu.core_type = #tpu.core_type<tc>, window_params = [{transform_indices = @transform_0, window_bounds = array<i64: 2, 8, 128>}, {pipeline_mode = #tpu.pipeline_mode<synchronous>, transform_indices = @transform_1, window_bounds = array<i64: 128, 1536>}, {pipeline_mode = #tpu.pipeline_mode<synchronous>, transform_indices = @transform_2, window_bounds = array<i64: 512, 128>}, {pipeline_mode = #tpu.pipeline_mode<synchronous>, transform_indices = @transform_3, window_bounds = array<i64: 1, 128>}, {transform_indices = @transform_4, window_bounds = array<i64: 2, 8, 128>}]} {
    %c0 = arith.constant 0 : index
    %c0_0 = arith.constant 0 : index
    %c0_1 = arith.constant 0 : index
    %0 = vector.load %arg1[%c0, %c0_0, %c0_1] : memref<2x8x128xf32, #tpu.memory_space<vmem>>, vector<2x8x128xf32>
    %1 = vector.shape_cast %0 : vector<2x8x128xf32> to vector<16x128xf32>
    %2 = arith.truncf %1 : vector<16x128xf32> to vector<16x128xbf16>
    %c0_2 = arith.constant 0 : index
    %c0_3 = arith.constant 0 : index
    %3 = vector.load %arg2[%c0_2, %c0_3] : memref<128x1536xbf16, #tpu.memory_space<vmem>>, vector<128x1536xbf16>
    %cst = arith.constant dense<0.000000e+00> : vector<16x1536xf32>
    %4 = tpu.matmul %2, %3, %cst {dimension_numbers = #tpu.dot_dimension_numbers<[1], [0], [0], [1], [0, 0, 1, 1], [], []>} : vector<16x128xbf16>, vector<128x1536xbf16>, vector<16x1536xf32> -> vector<16x1536xf32>
    %c0_4 = arith.constant 0 : index
    %c0_5 = arith.constant 0 : index
    %5 = vector.load %arg3[%c0_4, %c0_5] : memref<512x128xbf16, #tpu.memory_space<vmem>>, vector<512x128xbf16>
    %cst_6 = arith.constant 0.000000e+00 : f32
    %6 = vector.broadcast %cst_6 : f32 to vector<16x128xf32>
    %7 = vector.extract_strided_slice %4 {offsets = [0, 0], sizes = [16, 128], strides = [1, 1]} : vector<16x1536xf32> to vector<16x128xf32>
    %8 = vector.shape_cast %7 : vector<16x128xf32> to vector<2x8x128xf32>
    %9 = arith.truncf %8 : vector<2x8x128xf32> to vector<2x8x128xbf16>
    %10 = vector.extract_strided_slice %4 {offsets = [0, 512], sizes = [16, 128], strides = [1, 1]} : vector<16x1536xf32> to vector<16x128xf32>
    %11 = vector.shape_cast %10 : vector<16x128xf32> to vector<2x8x128xf32>
    %12 = arith.truncf %11 : vector<2x8x128xf32> to vector<2x8x128xbf16>
    %13 = vector.extract_strided_slice %4 {offsets = [0, 1024], sizes = [16, 128], strides = [1, 1]} : vector<16x1536xf32> to vector<16x128xf32>
    %14 = vector.shape_cast %13 : vector<16x128xf32> to vector<2x8x128xf32>
    %15 = arith.truncf %14 : vector<2x8x128xf32> to vector<2x8x128xbf16>
    "tpu.trace_start"() <{level = 10 : i32, message = "bqd,bkd->bqk"}> : () -> ()
    %cst_7 = arith.constant dense<0.000000e+00> : vector<2x8x8xf32>
    %16 = tpu.matmul %9, %12, %cst_7 {dimension_numbers = #tpu.dot_dimension_numbers<[2], [2], [1], [1], [0, 0, 0, 1, 1, 1], [0], [0]>} : vector<2x8x128xbf16>, vector<2x8x128xbf16>, vector<2x8x8xf32> -> vector<2x8x8xf32>
    "tpu.trace_stop"() : () -> ()
    %cst_8 = arith.constant dense<0xFF800000> : vector<2x8xf32>
    %17 = vector.multi_reduction <maximumf>, %16, %cst_8 [2] : vector<2x8x8xf32> to vector<2x8xf32>
    %18 = vector.shape_cast %17 : vector<2x8xf32> to vector<2x8x1xf32>
    %19 = vector.broadcast %18 : vector<2x8x1xf32> to vector<2x8x8xf32>
    %20 = arith.subf %16, %19 : vector<2x8x8xf32>
    %21 = math.exp %20 : vector<2x8x8xf32>
    %cst_9 = arith.constant dense<0.000000e+00> : vector<2x8xf32>
    %22 = vector.multi_reduction <add>, %21, %cst_9 [2] : vector<2x8x8xf32> to vector<2x8xf32>
    %23 = vector.shape_cast %22 : vector<2x8xf32> to vector<2x8x1xf32>
    %24 = tpu.reciprocal %23 {approx = true} : vector<2x8x1xf32> -> vector<2x8x1xf32>
    %25 = arith.truncf %21 : vector<2x8x8xf32> to vector<2x8x8xbf16>
    "tpu.trace_start"() <{level = 10 : i32, message = "bqk,bkd->bqd"}> : () -> ()
    %cst_10 = arith.constant dense<0.000000e+00> : vector<2x8x128xf32>
    %26 = tpu.matmul %25, %15, %cst_10 {dimension_numbers = #tpu.dot_dimension_numbers<[2], [1], [1], [2], [0, 0, 0, 1, 1, 2], [0], [0]>} : vector<2x8x8xbf16>, vector<2x8x128xbf16>, vector<2x8x128xf32> -> vector<2x8x128xf32>
    "tpu.trace_stop"() : () -> ()
    %27 = vector.broadcast %24 : vector<2x8x1xf32> to vector<2x8x128xf32>
    %28 = arith.mulf %26, %27 : vector<2x8x128xf32>
    %29 = vector.shape_cast %28 : vector<2x8x128xf32> to vector<16x128xf32>
    %30 = arith.truncf %29 : vector<16x128xf32> to vector<16x128xbf16>
    %31 = vector.extract_strided_slice %5 {offsets = [0, 0], sizes = [128, 128], strides = [1, 1]} : vector<512x128xbf16> to vector<128x128xbf16>
    %cst_11 = arith.constant dense<0.000000e+00> : vector<16x128xf32>
    %32 = tpu.matmul %30, %31, %cst_11 {dimension_numbers = #tpu.dot_dimension_numbers<[1], [0], [0], [1], [0, 0, 1, 1], [], []>} : vector<16x128xbf16>, vector<128x128xbf16>, vector<16x128xf32> -> vector<16x128xf32>
    %33 = arith.addf %6, %32 : vector<16x128xf32>
    %34 = vector.extract_strided_slice %4 {offsets = [0, 128], sizes = [16, 128], strides = [1, 1]} : vector<16x1536xf32> to vector<16x128xf32>
    %35 = vector.shape_cast %34 : vector<16x128xf32> to vector<2x8x128xf32>
    %36 = arith.truncf %35 : vector<2x8x128xf32> to vector<2x8x128xbf16>
    %37 = vector.extract_strided_slice %4 {offsets = [0, 640], sizes = [16, 128], strides = [1, 1]} : vector<16x1536xf32> to vector<16x128xf32>
    %38 = vector.shape_cast %37 : vector<16x128xf32> to vector<2x8x128xf32>
    %39 = arith.truncf %38 : vector<2x8x128xf32> to vector<2x8x128xbf16>
    %40 = vector.extract_strided_slice %4 {offsets = [0, 1152], sizes = [16, 128], strides = [1, 1]} : vector<16x1536xf32> to vector<16x128xf32>
    %41 = vector.shape_cast %40 : vector<16x128xf32> to vector<2x8x128xf32>
    %42 = arith.truncf %41 : vector<2x8x128xf32> to vector<2x8x128xbf16>
    "tpu.trace_start"() <{level = 10 : i32, message = "bqd,bkd->bqk"}> : () -> ()
    %cst_12 = arith.constant dense<0.000000e+00> : vector<2x8x8xf32>
    %43 = tpu.matmul %36, %39, %cst_12 {dimension_numbers = #tpu.dot_dimension_numbers<[2], [2], [1], [1], [0, 0, 0, 1, 1, 1], [0], [0]>} : vector<2x8x128xbf16>, vector<2x8x128xbf16>, vector<2x8x8xf32> -> vector<2x8x8xf32>
    "tpu.trace_stop"() : () -> ()
    %cst_13 = arith.constant dense<0xFF800000> : vector<2x8xf32>
    %44 = vector.multi_reduction <maximumf>, %43, %cst_13 [2] : vector<2x8x8xf32> to vector<2x8xf32>
    %45 = vector.shape_cast %44 : vector<2x8xf32> to vector<2x8x1xf32>
    %46 = vector.broadcast %45 : vector<2x8x1xf32> to vector<2x8x8xf32>
    %47 = arith.subf %43, %46 : vector<2x8x8xf32>
    %48 = math.exp %47 : vector<2x8x8xf32>
    %cst_14 = arith.constant dense<0.000000e+00> : vector<2x8xf32>
    %49 = vector.multi_reduction <add>, %48, %cst_14 [2] : vector<2x8x8xf32> to vector<2x8xf32>
    %50 = vector.shape_cast %49 : vector<2x8xf32> to vector<2x8x1xf32>
    %51 = tpu.reciprocal %50 {approx = true} : vector<2x8x1xf32> -> vector<2x8x1xf32>
    %52 = arith.truncf %48 : vector<2x8x8xf32> to vector<2x8x8xbf16>
    "tpu.trace_start"() <{level = 10 : i32, message = "bqk,bkd->bqd"}> : () -> ()
    %cst_15 = arith.constant dense<0.000000e+00> : vector<2x8x128xf32>
    %53 = tpu.matmul %52, %42, %cst_15 {dimension_numbers = #tpu.dot_dimension_numbers<[2], [1], [1], [2], [0, 0, 0, 1, 1, 2], [0], [0]>} : vector<2x8x8xbf16>, vector<2x8x128xbf16>, vector<2x8x128xf32> -> vector<2x8x128xf32>
    "tpu.trace_stop"() : () -> ()
    %54 = vector.broadcast %51 : vector<2x8x1xf32> to vector<2x8x128xf32>
    %55 = arith.mulf %53, %54 : vector<2x8x128xf32>
    %56 = vector.shape_cast %55 : vector<2x8x128xf32> to vector<16x128xf32>
    %57 = arith.truncf %56 : vector<16x128xf32> to vector<16x128xbf16>
    %58 = vector.extract_strided_slice %5 {offsets = [128, 0], sizes = [128, 128], strides = [1, 1]} : vector<512x128xbf16> to vector<128x128xbf16>
    %cst_16 = arith.constant dense<0.000000e+00> : vector<16x128xf32>
    %59 = tpu.matmul %57, %58, %cst_16 {dimension_numbers = #tpu.dot_dimension_numbers<[1], [0], [0], [1], [0, 0, 1, 1], [], []>} : vector<16x128xbf16>, vector<128x128xbf16>, vector<16x128xf32> -> vector<16x128xf32>
    %60 = arith.addf %33, %59 : vector<16x128xf32>
    %61 = vector.extract_strided_slice %4 {offsets = [0, 256], sizes = [16, 128], strides = [1, 1]} : vector<16x1536xf32> to vector<16x128xf32>
    %62 = vector.shape_cast %61 : vector<16x128xf32> to vector<2x8x128xf32>
    %63 = arith.truncf %62 : vector<2x8x128xf32> to vector<2x8x128xbf16>
    %64 = vector.extract_strided_slice %4 {offsets = [0, 768], sizes = [16, 128], strides = [1, 1]} : vector<16x1536xf32> to vector<16x128xf32>
    %65 = vector.shape_cast %64 : vector<16x128xf32> to vector<2x8x128xf32>
    %66 = arith.truncf %65 : vector<2x8x128xf32> to vector<2x8x128xbf16>
    %67 = vector.extract_strided_slice %4 {offsets = [0, 1280], sizes = [16, 128], strides = [1, 1]} : vector<16x1536xf32> to vector<16x128xf32>
    %68 = vector.shape_cast %67 : vector<16x128xf32> to vector<2x8x128xf32>
    %69 = arith.truncf %68 : vector<2x8x128xf32> to vector<2x8x128xbf16>
    "tpu.trace_start"() <{level = 10 : i32, message = "bqd,bkd->bqk"}> : () -> ()
    %cst_17 = arith.constant dense<0.000000e+00> : vector<2x8x8xf32>
    %70 = tpu.matmul %63, %66, %cst_17 {dimension_numbers = #tpu.dot_dimension_numbers<[2], [2], [1], [1], [0, 0, 0, 1, 1, 1], [0], [0]>} : vector<2x8x128xbf16>, vector<2x8x128xbf16>, vector<2x8x8xf32> -> vector<2x8x8xf32>
    "tpu.trace_stop"() : () -> ()
    %cst_18 = arith.constant dense<0xFF800000> : vector<2x8xf32>
    %71 = vector.multi_reduction <maximumf>, %70, %cst_18 [2] : vector<2x8x8xf32> to vector<2x8xf32>
    %72 = vector.shape_cast %71 : vector<2x8xf32> to vector<2x8x1xf32>
    %73 = vector.broadcast %72 : vector<2x8x1xf32> to vector<2x8x8xf32>
    %74 = arith.subf %70, %73 : vector<2x8x8xf32>
    %75 = math.exp %74 : vector<2x8x8xf32>
    %cst_19 = arith.constant dense<0.000000e+00> : vector<2x8xf32>
    %76 = vector.multi_reduction <add>, %75, %cst_19 [2] : vector<2x8x8xf32> to vector<2x8xf32>
    %77 = vector.shape_cast %76 : vector<2x8xf32> to vector<2x8x1xf32>
    %78 = tpu.reciprocal %77 {approx = true} : vector<2x8x1xf32> -> vector<2x8x1xf32>
    %79 = arith.truncf %75 : vector<2x8x8xf32> to vector<2x8x8xbf16>
    "tpu.trace_start"() <{level = 10 : i32, message = "bqk,bkd->bqd"}> : () -> ()
    %cst_20 = arith.constant dense<0.000000e+00> : vector<2x8x128xf32>
    %80 = tpu.matmul %79, %69, %cst_20 {dimension_numbers = #tpu.dot_dimension_numbers<[2], [1], [1], [2], [0, 0, 0, 1, 1, 2], [0], [0]>} : vector<2x8x8xbf16>, vector<2x8x128xbf16>, vector<2x8x128xf32> -> vector<2x8x128xf32>
    "tpu.trace_stop"() : () -> ()
    %81 = vector.broadcast %78 : vector<2x8x1xf32> to vector<2x8x128xf32>
    %82 = arith.mulf %80, %81 : vector<2x8x128xf32>
    %83 = vector.shape_cast %82 : vector<2x8x128xf32> to vector<16x128xf32>
    %84 = arith.truncf %83 : vector<16x128xf32> to vector<16x128xbf16>
    %85 = vector.extract_strided_slice %5 {offsets = [256, 0], sizes = [128, 128], strides = [1, 1]} : vector<512x128xbf16> to vector<128x128xbf16>
    %cst_21 = arith.constant dense<0.000000e+00> : vector<16x128xf32>
    %86 = tpu.matmul %84, %85, %cst_21 {dimension_numbers = #tpu.dot_dimension_numbers<[1], [0], [0], [1], [0, 0, 1, 1], [], []>} : vector<16x128xbf16>, vector<128x128xbf16>, vector<16x128xf32> -> vector<16x128xf32>
    %87 = arith.addf %60, %86 : vector<16x128xf32>
    %88 = vector.extract_strided_slice %4 {offsets = [0, 384], sizes = [16, 128], strides = [1, 1]} : vector<16x1536xf32> to vector<16x128xf32>
    %89 = vector.shape_cast %88 : vector<16x128xf32> to vector<2x8x128xf32>
    %90 = arith.truncf %89 : vector<2x8x128xf32> to vector<2x8x128xbf16>
    %91 = vector.extract_strided_slice %4 {offsets = [0, 896], sizes = [16, 128], strides = [1, 1]} : vector<16x1536xf32> to vector<16x128xf32>
    %92 = vector.shape_cast %91 : vector<16x128xf32> to vector<2x8x128xf32>
    %93 = arith.truncf %92 : vector<2x8x128xf32> to vector<2x8x128xbf16>
    %94 = vector.extract_strided_slice %4 {offsets = [0, 1408], sizes = [16, 128], strides = [1, 1]} : vector<16x1536xf32> to vector<16x128xf32>
    %95 = vector.shape_cast %94 : vector<16x128xf32> to vector<2x8x128xf32>
    %96 = arith.truncf %95 : vector<2x8x128xf32> to vector<2x8x128xbf16>
    "tpu.trace_start"() <{level = 10 : i32, message = "bqd,bkd->bqk"}> : () -> ()
    %cst_22 = arith.constant dense<0.000000e+00> : vector<2x8x8xf32>
    %97 = tpu.matmul %90, %93, %cst_22 {dimension_numbers = #tpu.dot_dimension_numbers<[2], [2], [1], [1], [0, 0, 0, 1, 1, 1], [0], [0]>} : vector<2x8x128xbf16>, vector<2x8x128xbf16>, vector<2x8x8xf32> -> vector<2x8x8xf32>
    "tpu.trace_stop"() : () -> ()
    %cst_23 = arith.constant dense<0xFF800000> : vector<2x8xf32>
    %98 = vector.multi_reduction <maximumf>, %97, %cst_23 [2] : vector<2x8x8xf32> to vector<2x8xf32>
    %99 = vector.shape_cast %98 : vector<2x8xf32> to vector<2x8x1xf32>
    %100 = vector.broadcast %99 : vector<2x8x1xf32> to vector<2x8x8xf32>
    %101 = arith.subf %97, %100 : vector<2x8x8xf32>
    %102 = math.exp %101 : vector<2x8x8xf32>
    %cst_24 = arith.constant dense<0.000000e+00> : vector<2x8xf32>
    %103 = vector.multi_reduction <add>, %102, %cst_24 [2] : vector<2x8x8xf32> to vector<2x8xf32>
    %104 = vector.shape_cast %103 : vector<2x8xf32> to vector<2x8x1xf32>
    %105 = tpu.reciprocal %104 {approx = true} : vector<2x8x1xf32> -> vector<2x8x1xf32>
    %106 = arith.truncf %102 : vector<2x8x8xf32> to vector<2x8x8xbf16>
    "tpu.trace_start"() <{level = 10 : i32, message = "bqk,bkd->bqd"}> : () -> ()
    %cst_25 = arith.constant dense<0.000000e+00> : vector<2x8x128xf32>
    %107 = tpu.matmul %106, %96, %cst_25 {dimension_numbers = #tpu.dot_dimension_numbers<[2], [1], [1], [2], [0, 0, 0, 1, 1, 2], [0], [0]>} : vector<2x8x8xbf16>, vector<2x8x128xbf16>, vector<2x8x128xf32> -> vector<2x8x128xf32>
    "tpu.trace_stop"() : () -> ()
    %108 = vector.broadcast %105 : vector<2x8x1xf32> to vector<2x8x128xf32>
    %109 = arith.mulf %107, %108 : vector<2x8x128xf32>
    %110 = vector.shape_cast %109 : vector<2x8x128xf32> to vector<16x128xf32>
    %111 = arith.truncf %110 : vector<16x128xf32> to vector<16x128xbf16>
    %112 = vector.extract_strided_slice %5 {offsets = [384, 0], sizes = [128, 128], strides = [1, 1]} : vector<512x128xbf16> to vector<128x128xbf16>
    %cst_26 = arith.constant dense<0.000000e+00> : vector<16x128xf32>
    %113 = tpu.matmul %111, %112, %cst_26 {dimension_numbers = #tpu.dot_dimension_numbers<[1], [0], [0], [1], [0, 0, 1, 1], [], []>} : vector<16x128xbf16>, vector<128x128xbf16>, vector<16x128xf32> -> vector<16x128xf32>
    %114 = arith.addf %87, %113 : vector<16x128xf32>
    %c0_27 = arith.constant 0 : index
    %c0_28 = arith.constant 0 : index
    %115 = vector.load %arg4[%c0_27, %c0_28] : memref<1x128xf32, #tpu.memory_space<vmem>>, vector<1x128xf32>
    %116 = vector.broadcast %115 : vector<1x128xf32> to vector<16x128xf32>
    %117 = arith.addf %114, %116 : vector<16x128xf32>
    %118 = vector.shape_cast %117 : vector<16x128xf32> to vector<2x8x128xf32>
    %c0_29 = arith.constant 0 : index
    %c0_30 = arith.constant 0 : index
    %c0_31 = arith.constant 0 : index
    %119 = vector.load %arg5[%c0_29, %c0_30, %c0_31] : memref<2x8x128xf32, #tpu.memory_space<vmem>>, vector<2x8x128xf32>
    tpu.vector_store %arg5[%c0_29, %c0_30, %c0_31], %118 {strides = array<i32>} : memref<2x8x128xf32, #tpu.memory_space<vmem>>, vector<2x8x128xf32>,
    return
  }
  func.func @transform_0(%arg0: i32) -> (i32, i32, i32) {
    %c0_i32 = arith.constant 0 : i32
    %c0_i32_0 = arith.constant 0 : i32
    %c0_i32_1 = arith.constant 0 : i32
    return %arg0, %c0_i32, %c0_i32_0 : i32, i32, i32
  }
  func.func @transform_1(%arg0: i32) -> (i32, i32) {
    %c0_i32 = arith.constant 0 : i32
    %c0_i32_0 = arith.constant 0 : i32
    %c0_i32_1 = arith.constant 0 : i32
    return %c0_i32, %c0_i32_0 : i32, i32
  }
  func.func @transform_2(%arg0: i32) -> (i32, i32) {
    %c0_i32 = arith.constant 0 : i32
    %c0_i32_0 = arith.constant 0 : i32
    %c0_i32_1 = arith.constant 0 : i32
    return %c0_i32, %c0_i32_0 : i32, i32
  }
  func.func @transform_3(%arg0: i32) -> (i32, i32) {
    %c0_i32 = arith.constant 0 : i32
    %c0_i32_0 = arith.constant 0 : i32
    %c0_i32_1 = arith.constant 0 : i32
    return %c0_i32, %c0_i32_0 : i32, i32
  }
  func.func @transform_4(%arg0: i32) -> (i32, i32, i32) {
    %c0_i32 = arith.constant 0 : i32
    %c0_i32_0 = arith.constant 0 : i32
    %c0_i32_1 = arith.constant 0 : i32
    return %arg0, %c0_i32, %c0_i32_0 : i32, i32, i32
  }
}

</mosaic_0001>

<llo_original>
// kernel: tpu_custom_call.1
$region0: #{tpu_custom_call.1}
  #allocation0 [shape = 'u32[]', space=smem, size = 0x4, offset = 0x4, fixed_abs, tag = 'smem constant byte address 0x4 - core index']
  #allocation1 [shape = 'u32[144,128]{1,0:T(1,128)}', space=vmem, size = 0x12000, scoped, tag = 'internal scratch']
  %s0 = inlined_call_operand.hbm [shape: f32[2,8,128], index: 0, kind: input, shape index: {}]
  %s1 = inlined_call_operand.hbm [shape: bf16[128,1536], index: 1, kind: input, shape index: {}]
  %s2 = inlined_call_operand.hbm [shape: bf16[512,128], index: 2, kind: input, shape index: {}]
  %s3 = inlined_call_operand.vmem [shape: f32[1,128], index: 3, kind: input, shape index: {}]
  %s4 = inlined_call_operand.hbm [shape: f32[2,8,128], index: 4, kind: output, shape index: {}]
  %s5 = sld [smem:[#allocation0]]
  $region38: #{tpu_custom_call.1} parent=0
    _
  %s7 = ssub.s32 1, %s5
  %s8 = scalar_select 0, %s7, %s5
  $region1: #{tpu_custom_call.1} parent=0
    #allocation2 [shape = 'u8[8192]{0}', space=vmem, size = 0x2000, scoped, tag = 'input window, operand 0, single buffered']
    #allocation3 [shape = 's32[1]{0}', space=sflag, size = 0x4, scoped, tag = 'scoped memory for tpu_custom_call.1']
    #allocation4 [shape = 's32[1]{0}', space=sflag, size = 0x4, scoped, tag = 'scoped memory for tpu_custom_call.1']
    #allocation5 [shape = 'u8[393216]{0}', space=vmem, size = 0x60000, scoped, tag = 'input window, operand 1, single buffered']
    #allocation6 [shape = 's32[1]{0}', space=sflag, size = 0x4, scoped, tag = 'scoped memory for tpu_custom_call.1']
    #allocation7 [shape = 'u8[131072]{0}', space=vmem, size = 0x20000, scoped, tag = 'input window, operand 2, single buffered']
    #allocation8 [shape = 'u8[8192]{0}', space=vmem, size = 0x2000, scoped, tag = 'output window, operand 0, single buffered']
    %9 = vsyncpa [#allocation3], 0
    %10 = vsyncpa [#allocation6], 0
    %11 = vsyncpa [#allocation4], 0
    // Predicated region
    $region2: #{tpu_custom_call.1} parent=1 // pred_check
      _
    $region3: #{tpu_custom_call.1} parent=1 // pred_check_branch
      %13 = sbr.rel (0) target = $region5
    $region4: #{tpu_custom_call.1} parent=1 // pred_region
      %s15 = ssub.s32 256, 256
      %16 = vsyncadd [#allocation3], %s15
      %s17 = sshll.u32 [#allocation2], 4
      %s18 = int_to_ptr.vmem [resolvable:$true] %s17
      %23 = dma.hbm_to_vmem [thread:$0]  %s0, 256, %s18, [#allocation3], 128, 128, 8
    $region5: #{tpu_custom_call.1} parent=1 // pred_fallthru
      _
    // Predicated region
    $region6: #{tpu_custom_call.1} parent=1 // pred_check
      _
    $region7: #{tpu_custom_call.1} parent=1 // pred_check_branch
      %25 = sbr.rel (0) target = $region9
    $region8: #{tpu_custom_call.1} parent=1 // pred_region
      %s27 = ssub.s32 12288, 12288
      %28 = vsyncadd [#allocation6], %s27
      %s29 = sshll.u32 [#allocation5], 4
      %s30 = int_to_ptr.vmem [resolvable:$true] %s29
      %35 = dma.hbm_to_vmem [thread:$0]  %s1, 12288, %s30, [#allocation6], 768, 768, 48
    $region9: #{tpu_custom_call.1} parent=1 // pred_fallthru
      _
    // Predicated region
    $region10: #{tpu_custom_call.1} parent=1 // pred_check
      _
    $region11: #{tpu_custom_call.1} parent=1 // pred_check_branch
      %37 = sbr.rel (0) target = $region13
    $region12: #{tpu_custom_call.1} parent=1 // pred_region
      %s39 = ssub.s32 4096, 4096
      %40 = vsyncadd [#allocation6], %s39
      %s41 = sshll.u32 [#allocation7], 4
      %s42 = int_to_ptr.vmem [resolvable:$true] %s41
      %47 = dma.hbm_to_vmem [thread:$0]  %s2, 4096, %s42, [#allocation6], 64, 64, 4
    $region13: #{tpu_custom_call.1} parent=1 // pred_fallthru
      _
    // Predicated region
    $region14: #{tpu_custom_call.1} parent=1 // pred_check
      _
    $region15: #{tpu_custom_call.1} parent=1 // pred_check_branch
      %49 = sbr.rel (0) target = $region17
    $region16: #{tpu_custom_call.1} parent=1 // pred_region
      _
    $region17: #{tpu_custom_call.1} parent=1 // pred_fallthru
      _
    // Predicated region
    $region18: #{tpu_custom_call.1} parent=1 // pred_check
      _
    $region19: #{tpu_custom_call.1} parent=1 // pred_check_branch
      %51 = sbr.rel (0) target = $region21
    $region20: #{tpu_custom_call.1} parent=1 // pred_region
      %52 = dma.done [#allocation3], 256
    $region21: #{tpu_custom_call.1} parent=1 // pred_fallthru
      _
    // Predicated region
    $region22: #{tpu_custom_call.1} parent=1 // pred_check
      _
    $region23: #{tpu_custom_call.1} parent=1 // pred_check_branch
      %54 = sbr.rel (0) target = $region25
    $region24: #{tpu_custom_call.1} parent=1 // pred_region
      %55 = dma.done [#allocation6], 12288
    $region25: #{tpu_custom_call.1} parent=1 // pred_fallthru
      _
    // Predicated region
    $region26: #{tpu_custom_call.1} parent=1 // pred_check
      _
    $region27: #{tpu_custom_call.1} parent=1 // pred_check_branch
      %57 = sbr.rel (0) target = $region29
    $region28: #{tpu_custom_call.1} parent=1 // pred_region
      %58 = dma.done [#allocation6], 4096
    $region29: #{tpu_custom_call.1} parent=1 // pred_fallthru
      _
    %v60 = vld [vmem:[#allocation2] sm:$0xff]
    %v61 = vld [vmem:[#allocation2 + $0x8] sm:$0xff]
    %v62 = vpack.c.bf16 %v61, %v60
    %v63 = vld [vmem:[#allocation5] sm:$0xff]
    %v64 = vld [vmem:[#allocation5 + $0x8] sm:$0xff]
    %v65 = vld [vmem:[#allocation5 + $0x10] sm:$0xff]
    %v66 = vld [vmem:[#allocation5 + $0x18] sm:$0xff]
    %v67 = vld [vmem:[#allocation5 + $0x20] sm:$0xff]
    %v68 = vld [vmem:[#allocation5 + $0x28] sm:$0xff]
    %v69 = vld [vmem:[#allocation5 + $0x30] sm:$0xff]
    %v70 = vld [vmem:[#allocation5 + $0x38] sm:$0xff]
    %v71 = vld [vmem:[#allocation5 + $0x40] sm:$0xff]
    %v72 = vld [vmem:[#allocation5 + $0x48] sm:$0xff]
    %v73 = vld [vmem:[#allocation5 + $0x50] sm:$0xff]
    %v74 = vld [vmem:[#allocation5 + $0x58] sm:$0xff]
    %v75 = vld [vmem:[#allocation5 + $0x60] sm:$0xff]
    %v76 = vld [vmem:[#allocation5 + $0x68] sm:$0xff]
    %v77 = vld [vmem:[#allocation5 + $0x70] sm:$0xff]
    %v78 = vld [vmem:[#allocation5 + $0x78] sm:$0xff]
    %v79 = vld [vmem:[#allocation5 + $0x80] sm:$0xff]
    %v80 = vld [vmem:[#allocation5 + $0x88] sm:$0xff]
    %v81 = vld [vmem:[#allocation5 + $0x90] sm:$0xff]
    %v82 = vld [vmem:[#allocation5 + $0x98] sm:$0xff]
    %v83 = vld [vmem:[#allocation5 + $0xa0] sm:$0xff]
    %v84 = vld [vmem:[#allocation5 + $0xa8] sm:$0xff]
    %v85 = vld [vmem:[#allocation5 + $0xb0] sm:$0xff]
    %v86 = vld [vmem:[#allocation5 + $0xb8] sm:$0xff]
    %v87 = vld [vmem:[#allocation5 + $0xc0] sm:$0xff]
    %v88 = vld [vmem:[#allocation5 + $0xc8] sm:$0xff]
    %v89 = vld [vmem:[#allocation5 + $0xd0] sm:$0xff]
    %v90 = vld [vmem:[#allocation5 + $0xd8] sm:$0xff]
    %v91 = vld [vmem:[#allocation5 + $0xe0] sm:$0xff]
    %v92 = vld [vmem:[#allocation5 + $0xe8] sm:$0xff]
    %v93 = vld [vmem:[#allocation5 + $0xf0] sm:$0xff]
    %v94 = vld [vmem:[#allocation5 + $0xf8] sm:$0xff]
    %v95 = vld [vmem:[#allocation5 + $0x100] sm:$0xff]
    %v96 = vld [vmem:[#allocation5 + $0x108] sm:$0xff]
    %v97 = vld [vmem:[#allocation5 + $0x110] sm:$0xff]
    %v98 = vld [vmem:[#allocation5 + $0x118] sm:$0xff]
    %v99 = vld [vmem:[#allocation5 + $0x120] sm:$0xff]
    %v100 = vld [vmem:[#allocation5 + $0x128] sm:$0xff]
    %v101 = vld [vmem:[#allocation5 + $0x130] sm:$0xff]
    %v102 = vld [vmem:[#allocation5 + $0x138] sm:$0xff]
    %v103 = vld [vmem:[#allocation5 + $0x140] sm:$0xff]
    %v104 = vld [vmem:[#allocation5 + $0x148] sm:$0xff]
    %v105 = vld [vmem:[#allocation5 + $0x150] sm:$0xff]
    %v106 = vld [vmem:[#allocation5 + $0x158] sm:$0xff]
    %v107 = vld [vmem:[#allocation5 + $0x160] sm:$0xff]
    %v108 = vld [vmem:[#allocation5 + $0x168] sm:$0xff]
    %v109 = vld [vmem:[#allocation5 + $0x170] sm:$0xff]
    %v110 = vld [vmem:[#allocation5 + $0x178] sm:$0xff]
    %v111 = vld [vmem:[#allocation5 + $0x180] sm:$0xff]
    %v112 = vld [vmem:[#allocation5 + $0x188] sm:$0xff]
    %v113 = vld [vmem:[#allocation5 + $0x190] sm:$0xff]
    %v114 = vld [vmem:[#allocation5 + $0x198] sm:$0xff]
    %v115 = vld [vmem:[#allocation5 + $0x1a0] sm:$0xff]
    %v116 = vld [vmem:[#allocation5 + $0x1a8] sm:$0xff]
    %v117 = vld [vmem:[#allocation5 + $0x1b0] sm:$0xff]
    %v118 = vld [vmem:[#allocation5 + $0x1b8] sm:$0xff]
    %v119 = vld [vmem:[#allocation5 + $0x1c0] sm:$0xff]
    %v120 = vld [vmem:[#allocation5 + $0x1c8] sm:$0xff]
    %v121 = vld [vmem:[#allocation5 + $0x1d0] sm:$0xff]
    %v122 = vld [vmem:[#allocation5 + $0x1d8] sm:$0xff]
    %v123 = vld [vmem:[#allocation5 + $0x1e0] sm:$0xff]
    %v124 = vld [vmem:[#allocation5 + $0x1e8] sm:$0xff]
    %v125 = vld [vmem:[#allocation5 + $0x1f0] sm:$0xff]
    %v126 = vld [vmem:[#allocation5 + $0x1f8] sm:$0xff]
    %v127 = vld [vmem:[#allocation5 + $0x200] sm:$0xff]
    %v128 = vld [vmem:[#allocation5 + $0x208] sm:$0xff]
    %v129 = vld [vmem:[#allocation5 + $0x210] sm:$0xff]
    %v130 = vld [vmem:[#allocation5 + $0x218] sm:$0xff]
    %v131 = vld [vmem:[#allocation5 + $0x220] sm:$0xff]
    %v132 = vld [vmem:[#allocation5 + $0x228] sm:$0xff]
    %v133 = vld [vmem:[#allocation5 + $0x230] sm:$0xff]
    %v134 = vld [vmem:[#allocation5 + $0x238] sm:$0xff]
    %v135 = vld [vmem:[#allocation5 + $0x240] sm:$0xff]
    %v136 = vld [vmem:[#allocation5 + $0x248] sm:$0xff]
    %v137 = vld [vmem:[#allocation5 + $0x250] sm:$0xff]
    %v138 = vld [vmem:[#allocation5 + $0x258] sm:$0xff]
    %v139 = vld [vmem:[#allocation5 + $0x260] sm:$0xff]
    %v140 = vld [vmem:[#allocation5 + $0x268] sm:$0xff]
    %v141 = vld [vmem:[#allocation5 + $0x270] sm:$0xff]
    %v142 = vld [vmem:[#allocation5 + $0x278] sm:$0xff]
    %v143 = vld [vmem:[#allocation5 + $0x280] sm:$0xff]
    %v144 = vld [vmem:[#allocation5 + $0x288] sm:$0xff]
    %v145 = vld [vmem:[#allocation5 + $0x290] sm:$0xff]
    %v146 = vld [vmem:[#allocation5 + $0x298] sm:$0xff]
    %v147 = vld [vmem:[#allocation5 + $0x2a0] sm:$0xff]
    %v148 = vld [vmem:[#allocation5 + $0x2a8] sm:$0xff]
    %v149 = vld [vmem:[#allocation5 + $0x2b0] sm:$0xff]
    %v150 = vld [vmem:[#allocation5 + $0x2b8] sm:$0xff]
    %v151 = vld [vmem:[#allocation5 + $0x2c0] sm:$0xff]
    %v152 = vld [vmem:[#allocation5 + $0x2c8] sm:$0xff]
    %v153 = vld [vmem:[#allocation5 + $0x2d0] sm:$0xff]
    %v154 = vld [vmem:[#allocation5 + $0x2d8] sm:$0xff]
    %v155 = vld [vmem:[#allocation5 + $0x2e0] sm:$0xff]
    %v156 = vld [vmem:[#allocation5 + $0x2e8] sm:$0xff]
    %v157 = vld [vmem:[#allocation5 + $0x2f0] sm:$0xff]
    %v158 = vld [vmem:[#allocation5 + $0x2f8] sm:$0xff]
    %v255 = vunpack.c.l.b16 %v63
    %v256 = vunpack.c.h.b16 %v63
    %v257 = vunpack.c.l.b16 %v64
    %v258 = vunpack.c.h.b16 %v64
    %v259 = vunpack.c.l.b16 %v65
    %v260 = vunpack.c.h.b16 %v65
    %v261 = vunpack.c.l.b16 %v66
    %v262 = vunpack.c.h.b16 %v66
    %v263 = vunpack.c.l.b16 %v67
    %v264 = vunpack.c.h.b16 %v67
    %v265 = vunpack.c.l.b16 %v68
    %v266 = vunpack.c.h.b16 %v68
    %v267 = vunpack.c.l.b16 %v69
    %v268 = vunpack.c.h.b16 %v69
    %v269 = vunpack.c.l.b16 %v70
    %v270 = vunpack.c.h.b16 %v70
    %v271 = vunpack.c.l.b16 %v71
    %v272 = vunpack.c.h.b16 %v71
    %v273 = vunpack.c.l.b16 %v72
    %v274 = vunpack.c.h.b16 %v72
    %v275 = vunpack.c.l.b16 %v73
    %v276 = vunpack.c.h.b16 %v73
    %v277 = vunpack.c.l.b16 %v74
    %v278 = vunpack.c.h.b16 %v74
    %v279 = vunpack.c.l.b16 %v75
    %v280 = vunpack.c.h.b16 %v75
    %v281 = vunpack.c.l.b16 %v76
    %v282 = vunpack.c.h.b16 %v76
    %v283 = vunpack.c.l.b16 %v77
    %v284 = vunpack.c.h.b16 %v77
    %v285 = vunpack.c.l.b16 %v78
    %v286 = vunpack.c.h.b16 %v78
    %v287 = vunpack.c.l.b16 %v79
    %v288 = vunpack.c.h.b16 %v79
    %v289 = vunpack.c.l.b16 %v80
    %v290 = vunpack.c.h.b16 %v80
    %v291 = vunpack.c.l.b16 %v81
    %v292 = vunpack.c.h.b16 %v81
    %v293 = vunpack.c.l.b16 %v82
    %v294 = vunpack.c.h.b16 %v82
    %v295 = vunpack.c.l.b16 %v83
    %v296 = vunpack.c.h.b16 %v83
    %v297 = vunpack.c.l.b16 %v84
    %v298 = vunpack.c.h.b16 %v84
    %v299 = vunpack.c.l.b16 %v85
    %v300 = vunpack.c.h.b16 %v85
    %v301 = vunpack.c.l.b16 %v86
    %v302 = vunpack.c.h.b16 %v86
    %v303 = vunpack.c.l.b16 %v87
    %v304 = vunpack.c.h.b16 %v87
    %v305 = vunpack.c.l.b16 %v88
    %v306 = vunpack.c.h.b16 %v88
    %v307 = vunpack.c.l.b16 %v89
    %v308 = vunpack.c.h.b16 %v89
    %v309 = vunpack.c.l.b16 %v90
    %v310 = vunpack.c.h.b16 %v90
    %v311 = vunpack.c.l.b16 %v91
    %v312 = vunpack.c.h.b16 %v91
    %v313 = vunpack.c.l.b16 %v92
    %v314 = vunpack.c.h.b16 %v92
    %v315 = vunpack.c.l.b16 %v93
    %v316 = vunpack.c.h.b16 %v93
    %v317 = vunpack.c.l.b16 %v94
    %v318 = vunpack.c.h.b16 %v94
    %v319 = vunpack.c.l.b16 %v95
    %v320 = vunpack.c.h.b16 %v95
    %v321 = vunpack.c.l.b16 %v96
    %v322 = vunpack.c.h.b16 %v96
    %v323 = vunpack.c.l.b16 %v97
    %v324 = vunpack.c.h.b16 %v97
    %v325 = vunpack.c.l.b16 %v98
    %v326 = vunpack.c.h.b16 %v98
    %v327 = vunpack.c.l.b16 %v99
    %v328 = vunpack.c.h.b16 %v99
    %v329 = vunpack.c.l.b16 %v100
    %v330 = vunpack.c.h.b16 %v100
    %v331 = vunpack.c.l.b16 %v101
    %v332 = vunpack.c.h.b16 %v101
    %v333 = vunpack.c.l.b16 %v102
    %v334 = vunpack.c.h.b16 %v102
    %v335 = vunpack.c.l.b16 %v103
    %v336 = vunpack.c.h.b16 %v103
    %v337 = vunpack.c.l.b16 %v104
    %v338 = vunpack.c.h.b16 %v104
    %v339 = vunpack.c.l.b16 %v105
    %v340 = vunpack.c.h.b16 %v105
    %v341 = vunpack.c.l.b16 %v106
    %v342 = vunpack.c.h.b16 %v106
    %v343 = vunpack.c.l.b16 %v107
    %v344 = vunpack.c.h.b16 %v107
    %v345 = vunpack.c.l.b16 %v108
    %v346 = vunpack.c.h.b16 %v108
    %v347 = vunpack.c.l.b16 %v109
    %v348 = vunpack.c.h.b16 %v109
    %v349 = vunpack.c.l.b16 %v110
    %v350 = vunpack.c.h.b16 %v110
    %v351 = vunpack.c.l.b16 %v111
    %v352 = vunpack.c.h.b16 %v111
    %v353 = vunpack.c.l.b16 %v112
    %v354 = vunpack.c.h.b16 %v112
    %v355 = vunpack.c.l.b16 %v113
    %v356 = vunpack.c.h.b16 %v113
    %v357 = vunpack.c.l.b16 %v114
    %v358 = vunpack.c.h.b16 %v114
    %v359 = vunpack.c.l.b16 %v115
    %v360 = vunpack.c.h.b16 %v115
    %v361 = vunpack.c.l.b16 %v116
    %v362 = vunpack.c.h.b16 %v116
    %v363 = vunpack.c.l.b16 %v117
    %v364 = vunpack.c.h.b16 %v117
    %v365 = vunpack.c.l.b16 %v118
    %v366 = vunpack.c.h.b16 %v118
    %v367 = vunpack.c.l.b16 %v119
    %v368 = vunpack.c.h.b16 %v119
    %v369 = vunpack.c.l.b16 %v120
    %v370 = vunpack.c.h.b16 %v120
    %v371 = vunpack.c.l.b16 %v121
    %v372 = vunpack.c.h.b16 %v121
    %v373 = vunpack.c.l.b16 %v122
    %v374 = vunpack.c.h.b16 %v122
    %v375 = vunpack.c.l.b16 %v123
    %v376 = vunpack.c.h.b16 %v123
    %v377 = vunpack.c.l.b16 %v124
    %v378 = vunpack.c.h.b16 %v124
    %v379 = vunpack.c.l.b16 %v125
    %v380 = vunpack.c.h.b16 %v125
    %v381 = vunpack.c.l.b16 %v126
    %v382 = vunpack.c.h.b16 %v126
    %v383 = vunpack.c.l.b16 %v127
    %v384 = vunpack.c.h.b16 %v127
    %v385 = vunpack.c.l.b16 %v128
    %v386 = vunpack.c.h.b16 %v128
    %v387 = vunpack.c.l.b16 %v129
    %v388 = vunpack.c.h.b16 %v129
    %v389 = vunpack.c.l.b16 %v130
    %v390 = vunpack.c.h.b16 %v130
    %v391 = vunpack.c.l.b16 %v131
    %v392 = vunpack.c.h.b16 %v131
    %v393 = vunpack.c.l.b16 %v132
    %v394 = vunpack.c.h.b16 %v132
    %v395 = vunpack.c.l.b16 %v133
    %v396 = vunpack.c.h.b16 %v133
    %v397 = vunpack.c.l.b16 %v134
    %v398 = vunpack.c.h.b16 %v134
    %v399 = vunpack.c.l.b16 %v135
    %v400 = vunpack.c.h.b16 %v135
    %v401 = vunpack.c.l.b16 %v136
    %v402 = vunpack.c.h.b16 %v136
    %v403 = vunpack.c.l.b16 %v137
    %v404 = vunpack.c.h.b16 %v137
    %v405 = vunpack.c.l.b16 %v138
    %v406 = vunpack.c.h.b16 %v138
    %v407 = vunpack.c.l.b16 %v139
    %v408 = vunpack.c.h.b16 %v139
    %v409 = vunpack.c.l.b16 %v140
    %v410 = vunpack.c.h.b16 %v140
    %v411 = vunpack.c.l.b16 %v141
    %v412 = vunpack.c.h.b16 %v141
    %v413 = vunpack.c.l.b16 %v142
    %v414 = vunpack.c.h.b16 %v142
    %v415 = vunpack.c.l.b16 %v143
    %v416 = vunpack.c.h.b16 %v143
    %v417 = vunpack.c.l.b16 %v144
    %v418 = vunpack.c.h.b16 %v144
    %v419 = vunpack.c.l.b16 %v145
    %v420 = vunpack.c.h.b16 %v145
    %v421 = vunpack.c.l.b16 %v146
    %v422 = vunpack.c.h.b16 %v146
    %v423 = vunpack.c.l.b16 %v147
    %v424 = vunpack.c.h.b16 %v147
    %v425 = vunpack.c.l.b16 %v148
    %v426 = vunpack.c.h.b16 %v148
    %v427 = vunpack.c.l.b16 %v149
    %v428 = vunpack.c.h.b16 %v149
    %v429 = vunpack.c.l.b16 %v150
    %v430 = vunpack.c.h.b16 %v150
    %v431 = vunpack.c.l.b16 %v151
    %v432 = vunpack.c.h.b16 %v151
    %v433 = vunpack.c.l.b16 %v152
    %v434 = vunpack.c.h.b16 %v152
    %v435 = vunpack.c.l.b16 %v153
    %v436 = vunpack.c.h.b16 %v153
    %v437 = vunpack.c.l.b16 %v154
    %v438 = vunpack.c.h.b16 %v154
    %v439 = vunpack.c.l.b16 %v155
    %v440 = vunpack.c.h.b16 %v155
    %v441 = vunpack.c.l.b16 %v156
    %v442 = vunpack.c.h.b16 %v156
    %v443 = vunpack.c.l.b16 %v157
    %v444 = vunpack.c.h.b16 %v157
    %v445 = vunpack.c.l.b16 %v158
    %v446 = vunpack.c.h.b16 %v158
    %v447 = vpack.c.b16 %v267, %v255
    %v448 = vpack.c.b16 %v268, %v256
    %v449 = vpack.c.b16 %v269, %v257
    %v450 = vpack.c.b16 %v270, %v258
    %v451 = vpack.c.b16 %v271, %v259
    %v452 = vpack.c.b16 %v272, %v260
    %v453 = vpack.c.b16 %v273, %v261
    %v454 = vpack.c.b16 %v274, %v262
    %v455 = vpack.c.b16 %v275, %v263
    %v456 = vpack.c.b16 %v276, %v264
    %v457 = vpack.c.b16 %v277, %v265
    %v458 = vpack.c.b16 %v278, %v266
    %v459 = vpack.c.b16 %v291, %v279
    %v460 = vpack.c.b16 %v292, %v280
    %v461 = vpack.c.b16 %v293, %v281
    %v462 = vpack.c.b16 %v294, %v282
    %v463 = vpack.c.b16 %v295, %v283
    %v464 = vpack.c.b16 %v296, %v284
    %v465 = vpack.c.b16 %v297, %v285
    %v466 = vpack.c.b16 %v298, %v286
    %v467 = vpack.c.b16 %v299, %v287
    %v468 = vpack.c.b16 %v300, %v288
    %v469 = vpack.c.b16 %v301, %v289
    %v470 = vpack.c.b16 %v302, %v290
    %v471 = vpack.c.b16 %v315, %v303
    %v472 = vpack.c.b16 %v316, %v304
    %v473 = vpack.c.b16 %v317, %v305
    %v474 = vpack.c.b16 %v318, %v306
    %v475 = vpack.c.b16 %v319, %v307
    %v476 = vpack.c.b16 %v320, %v308
    %v477 = vpack.c.b16 %v321, %v309
    %v478 = vpack.c.b16 %v322, %v310
    %v479 = vpack.c.b16 %v323, %v311
    %v480 = vpack.c.b16 %v324, %v312
    %v481 = vpack.c.b16 %v325, %v313
    %v482 = vpack.c.b16 %v326, %v314
    %v483 = vpack.c.b16 %v339, %v327
    %v484 = vpack.c.b16 %v340, %v328
    %v485 = vpack.c.b16 %v341, %v329
    %v486 = vpack.c.b16 %v342, %v330
    %v487 = vpack.c.b16 %v343, %v331
    %v488 = vpack.c.b16 %v344, %v332
    %v489 = vpack.c.b16 %v345, %v333
    %v490 = vpack.c.b16 %v346, %v334
    %v491 = vpack.c.b16 %v347, %v335
    %v492 = vpack.c.b16 %v348, %v336
    %v493 = vpack.c.b16 %v349, %v337
    %v494 = vpack.c.b16 %v350, %v338
    %v495 = vpack.c.b16 %v363, %v351
    %v496 = vpack.c.b16 %v364, %v352
    %v497 = vpack.c.b16 %v365, %v353
    %v498 = vpack.c.b16 %v366, %v354
    %v499 = vpack.c.b16 %v367, %v355
    %v500 = vpack.c.b16 %v368, %v356
    %v501 = vpack.c.b16 %v369, %v357
    %v502 = vpack.c.b16 %v370, %v358
    %v503 = vpack.c.b16 %v371, %v359
    %v504 = vpack.c.b16 %v372, %v360
    %v505 = vpack.c.b16 %v373, %v361
    %v506 = vpack.c.b16 %v374, %v362
    %v507 = vpack.c.b16 %v387, %v375
    %v508 = vpack.c.b16 %v388, %v376
    %v509 = vpack.c.b16 %v389, %v377
    %v510 = vpack.c.b16 %v390, %v378
    %v511 = vpack.c.b16 %v391, %v379
    %v512 = vpack.c.b16 %v392, %v380
    %v513 = vpack.c.b16 %v393, %v381
    %v514 = vpack.c.b16 %v394, %v382
    %v515 = vpack.c.b16 %v395, %v383
    %v516 = vpack.c.b16 %v396, %v384
    %v517 = vpack.c.b16 %v397, %v385
    %v518 = vpack.c.b16 %v398, %v386
    %v519 = vpack.c.b16 %v411, %v399
    %v520 = vpack.c.b16 %v412, %v400
    %v521 = vpack.c.b16 %v413, %v401
    %v522 = vpack.c.b16 %v414, %v402
    %v523 = vpack.c.b16 %v415, %v403
    %v524 = vpack.c.b16 %v416, %v404
    %v525 = vpack.c.b16 %v417, %v405
    %v526 = vpack.c.b16 %v418, %v406
    %v527 = vpack.c.b16 %v419, %v407
    %v528 = vpack.c.b16 %v420, %v408
    %v529 = vpack.c.b16 %v421, %v409
    %v530 = vpack.c.b16 %v422, %v410
    %v531 = vpack.c.b16 %v435, %v423
    %v532 = vpack.c.b16 %v436, %v424
    %v533 = vpack.c.b16 %v437, %v425
    %v534 = vpack.c.b16 %v438, %v426
    %v535 = vpack.c.b16 %v439, %v427
    %v536 = vpack.c.b16 %v440, %v428
    %v537 = vpack.c.b16 %v441, %v429
    %v538 = vpack.c.b16 %v442, %v430
    %v539 = vpack.c.b16 %v443, %v431
    %v540 = vpack.c.b16 %v444, %v432
    %v541 = vpack.c.b16 %v445, %v433
    %v542 = vpack.c.b16 %v446, %v434
    %639 = vmatprep.subr.bf16.mxu0 %v532
    %640 = vmatpush1.bf16.msra.mxu0 %v531
    %641 = vmatprep.subr.bf16.mxu0 %v520
    %642 = vmatpush1.bf16.msra.mxu0 %v519
    %643 = vmatprep.subr.bf16.mxu0 %v508
    %644 = vmatpush1.bf16.msra.mxu0 %v507
    %645 = vmatprep.subr.bf16.mxu0 %v496
    %646 = vmatpush1.bf16.msra.mxu0 %v495
    %647 = vmatprep.subr.bf16.mxu0 %v484
    %648 = vmatpush1.bf16.msra.mxu0 %v483
    %649 = vmatprep.subr.bf16.mxu0 %v472
    %650 = vmatpush1.bf16.msra.mxu0 %v471
    %651 = vmatprep.subr.bf16.mxu0 %v460
    %652 = vmatpush1.bf16.msra.mxu0 %v459
    %653 = vmatprep.subr.bf16.mxu0 %v448
    %654 = vmatpush1.bf16.msra.mxu0 %v447
    %655 = vmatprep.subr.bf16.mxu0 0
    %656 = vmatpush2.bf16.msra.mxu0 0
    %657 = vmatprep.subr.bf16.mxu0 0
    %658 = vmatpush2.bf16.msra.mxu0 0
    %659 = vmatprep.subr.bf16.mxu0 0
    %660 = vmatpush2.bf16.msra.mxu0 0
    %661 = vmatprep.subr.bf16.mxu0 0
    %662 = vmatpush2.bf16.msra.mxu0 0
    %663 = vmatprep.subr.bf16.mxu0 0
    %664 = vmatpush2.bf16.msra.mxu0 0
    %665 = vmatprep.subr.bf16.mxu0 0
    %666 = vmatpush2.bf16.msra.mxu0 0
    %667 = vmatprep.subr.bf16.mxu0 0
    %668 = vmatpush2.bf16.msra.mxu0 0
    %669 = vmatprep.subr.bf16.mxu0 0
    %670 = vmatpush2.bf16.msra.mxu0 0
    %671 = vmatprep.mubr.bf16.mxu0 0
    %672 = vmatmul.mubr.bf16.gmra.mxu0 %v62
    %v673 = vpop.f32.mrf.mxu0
    %v674 = vadd.f32 0.0, %v673
    %v675 = vpop.f32.mrf.mxu0
    %v676 = vadd.f32 0.0, %v675
    %v677 = vpop.f32.mrf.mxu0
    %v678 = vadd.f32 0.0, %v677
    %v679 = vpop.f32.mrf.mxu0
    %v680 = vadd.f32 0.0, %v679
    %681 = vdwg.mxu0
    %682 = vmatprep.subr.bf16.mxu0 %v534
    %683 = vmatpush1.bf16.msra.mxu0 %v533
    %684 = vmatprep.subr.bf16.mxu0 %v522
    %685 = vmatpush1.bf16.msra.mxu0 %v521
    %686 = vmatprep.subr.bf16.mxu0 %v510
    %687 = vmatpush1.bf16.msra.mxu0 %v509
    %688 = vmatprep.subr.bf16.mxu0 %v498
    %689 = vmatpush1.bf16.msra.mxu0 %v497
    %690 = vmatprep.subr.bf16.mxu0 %v486
    %691 = vmatpush1.bf16.msra.mxu0 %v485
    %692 = vmatprep.subr.bf16.mxu0 %v474
    %693 = vmatpush1.bf16.msra.mxu0 %v473
    %694 = vmatprep.subr.bf16.mxu0 %v462
    %695 = vmatpush1.bf16.msra.mxu0 %v461
    %696 = vmatprep.subr.bf16.mxu0 %v450
    %697 = vmatpush1.bf16.msra.mxu0 %v449
    %698 = vmatprep.subr.bf16.mxu0 0
    %699 = vmatpush2.bf16.msra.mxu0 0
    %700 = vmatprep.subr.bf16.mxu0 0
    %701 = vmatpush2.bf16.msra.mxu0 0
    %702 = vmatprep.subr.bf16.mxu0 0
    %703 = vmatpush2.bf16.msra.mxu0 0
    %704 = vmatprep.subr.bf16.mxu0 0
    %705 = vmatpush2.bf16.msra.mxu0 0
    %706 = vmatprep.subr.bf16.mxu0 0
    %707 = vmatpush2.bf16.msra.mxu0 0
    %708 = vmatprep.subr.bf16.mxu0 0
    %709 = vmatpush2.bf16.msra.mxu0 0
    %710 = vmatprep.subr.bf16.mxu0 0
    %711 = vmatpush2.bf16.msra.mxu0 0
    %712 = vmatprep.subr.bf16.mxu0 0
    %713 = vmatpush2.bf16.msra.mxu0 0
    %714 = vmatprep.mubr.bf16.mxu0 0
    %715 = vmatmul.mubr.bf16.gmra.mxu0 %v62
    %v716 = vpop.f32.mrf.mxu0
    %v717 = vadd.f32 0.0, %v716
    %v718 = vpop.f32.mrf.mxu0
    %v719 = vadd.f32 0.0, %v718
    %v720 = vpop.f32.mrf.mxu0
    %v721 = vadd.f32 0.0, %v720
    %v722 = vpop.f32.mrf.mxu0
    %v723 = vadd.f32 0.0, %v722
    %724 = vdwg.mxu0
    %725 = vmatprep.subr.bf16.mxu0 %v536
    %726 = vmatpush1.bf16.msra.mxu0 %v535
    %727 = vmatprep.subr.bf16.mxu0 %v524
    %728 = vmatpush1.bf16.msra.mxu0 %v523
    %729 = vmatprep.subr.bf16.mxu0 %v512
    %730 = vmatpush1.bf16.msra.mxu0 %v511
    %731 = vmatprep.subr.bf16.mxu0 %v500
    %732 = vmatpush1.bf16.msra.mxu0 %v499
    %733 = vmatprep.subr.bf16.mxu0 %v488
    %734 = vmatpush1.bf16.msra.mxu0 %v487
    %735 = vmatprep.subr.bf16.mxu0 %v476
    %736 = vmatpush1.bf16.msra.mxu0 %v475
    %737 = vmatprep.subr.bf16.mxu0 %v464
    %738 = vmatpush1.bf16.msra.mxu0 %v463
    %739 = vmatprep.subr.bf16.mxu0 %v452
    %740 = vmatpush1.bf16.msra.mxu0 %v451
    %741 = vmatprep.subr.bf16.mxu0 0
    %742 = vmatpush2.bf16.msra.mxu0 0
    %743 = vmatprep.subr.bf16.mxu0 0
    %744 = vmatpush2.bf16.msra.mxu0 0
    %745 = vmatprep.subr.bf16.mxu0 0
    %746 = vmatpush2.bf16.msra.mxu0 0
    %747 = vmatprep.subr.bf16.mxu0 0
    %748 = vmatpush2.bf16.msra.mxu0 0
    %749 = vmatprep.subr.bf16.mxu0 0
    %750 = vmatpush2.bf16.msra.mxu0 0
    %751 = vmatprep.subr.bf16.mxu0 0
    %752 = vmatpush2.bf16.msra.mxu0 0
    %753 = vmatprep.subr.bf16.mxu0 0
    %754 = vmatpush2.bf16.msra.mxu0 0
    %755 = vmatprep.subr.bf16.mxu0 0
    %756 = vmatpush2.bf16.msra.mxu0 0
    %757 = vmatprep.mubr.bf16.mxu0 0
    %758 = vmatmul.mubr.bf16.gmra.mxu0 %v62
    %v759 = vpop.f32.mrf.mxu0
    %v760 = vadd.f32 0.0, %v759
    %v761 = vpop.f32.mrf.mxu0
    %v762 = vadd.f32 0.0, %v761
    %v763 = vpop.f32.mrf.mxu0
    %v764 = vadd.f32 0.0, %v763
    %v765 = vpop.f32.mrf.mxu0
    %v766 = vadd.f32 0.0, %v765
    %767 = vdwg.mxu0
    %768 = vmatprep.subr.bf16.mxu0 %v538
    %769 = vmatpush1.bf16.msra.mxu0 %v537
    %770 = vmatprep.subr.bf16.mxu0 %v526
    %771 = vmatpush1.bf16.msra.mxu0 %v525
    %772 = vmatprep.subr.bf16.mxu0 %v514
    %773 = vmatpush1.bf16.msra.mxu0 %v513
    %774 = vmatprep.subr.bf16.mxu0 %v502
    %775 = vmatpush1.bf16.msra.mxu0 %v501
    %776 = vmatprep.subr.bf16.mxu0 %v490
    %777 = vmatpush1.bf16.msra.mxu0 %v489
    %778 = vmatprep.subr.bf16.mxu0 %v478
    %779 = vmatpush1.bf16.msra.mxu0 %v477
    %780 = vmatprep.subr.bf16.mxu0 %v466
    %781 = vmatpush1.bf16.msra.mxu0 %v465
    %782 = vmatprep.subr.bf16.mxu0 %v454
    %783 = vmatpush1.bf16.msra.mxu0 %v453
    %784 = vmatprep.subr.bf16.mxu0 0
    %785 = vmatpush2.bf16.msra.mxu0 0
    %786 = vmatprep.subr.bf16.mxu0 0
    %787 = vmatpush2.bf16.msra.mxu0 0
    %788 = vmatprep.subr.bf16.mxu0 0
    %789 = vmatpush2.bf16.msra.mxu0 0
    %790 = vmatprep.subr.bf16.mxu0 0
    %791 = vmatpush2.bf16.msra.mxu0 0
    %792 = vmatprep.subr.bf16.mxu0 0
    %793 = vmatpush2.bf16.msra.mxu0 0
    %794 = vmatprep.subr.bf16.mxu0 0
    %795 = vmatpush2.bf16.msra.mxu0 0
    %796 = vmatprep.subr.bf16.mxu0 0
    %797 = vmatpush2.bf16.msra.mxu0 0
    %798 = vmatprep.subr.bf16.mxu0 0
    %799 = vmatpush2.bf16.msra.mxu0 0
    %800 = vmatprep.mubr.bf16.mxu0 0
    %801 = vmatmul.mubr.bf16.gmra.mxu0 %v62
    %v802 = vpop.f32.mrf.mxu0
    %v803 = vadd.f32 0.0, %v802
    %v804 = vpop.f32.mrf.mxu0
    %v805 = vadd.f32 0.0, %v804
    %v806 = vpop.f32.mrf.mxu0
    %v807 = vadd.f32 0.0, %v806
    %v808 = vpop.f32.mrf.mxu0
    %v809 = vadd.f32 0.0, %v808
    %810 = vdwg.mxu0
    %811 = vmatprep.subr.bf16.mxu0 %v540
    %812 = vmatpush1.bf16.msra.mxu0 %v539
    %813 = vmatprep.subr.bf16.mxu0 %v528
    %814 = vmatpush1.bf16.msra.mxu0 %v527
    %815 = vmatprep.subr.bf16.mxu0 %v516
    %816 = vmatpush1.bf16.msra.mxu0 %v515
    %817 = vmatprep.subr.bf16.mxu0 %v504
    %818 = vmatpush1.bf16.msra.mxu0 %v503
    %819 = vmatprep.subr.bf16.mxu0 %v492
    %820 = vmatpush1.bf16.msra.mxu0 %v491
    %821 = vmatprep.subr.bf16.mxu0 %v480
    %822 = vmatpush1.bf16.msra.mxu0 %v479
    %823 = vmatprep.subr.bf16.mxu0 %v468
    %824 = vmatpush1.bf16.msra.mxu0 %v467
    %825 = vmatprep.subr.bf16.mxu0 %v456
    %826 = vmatpush1.bf16.msra.mxu0 %v455
    %827 = vmatprep.subr.bf16.mxu0 0
    %828 = vmatpush2.bf16.msra.mxu0 0
    %829 = vmatprep.subr.bf16.mxu0 0
    %830 = vmatpush2.bf16.msra.mxu0 0
    %831 = vmatprep.subr.bf16.mxu0 0
    %832 = vmatpush2.bf16.msra.mxu0 0
    %833 = vmatprep.subr.bf16.mxu0 0
    %834 = vmatpush2.bf16.msra.mxu0 0
    %835 = vmatprep.subr.bf16.mxu0 0
    %836 = vmatpush2.bf16.msra.mxu0 0
    %837 = vmatprep.subr.bf16.mxu0 0
    %838 = vmatpush2.bf16.msra.mxu0 0
    %839 = vmatprep.subr.bf16.mxu0 0
    %840 = vmatpush2.bf16.msra.mxu0 0
    %841 = vmatprep.subr.bf16.mxu0 0
    %842 = vmatpush2.bf16.msra.mxu0 0
    %843 = vmatprep.mubr.bf16.mxu0 0
    %844 = vmatmul.mubr.bf16.gmra.mxu0 %v62
    %v845 = vpop.f32.mrf.mxu0
    %v846 = vadd.f32 0.0, %v845
    %v847 = vpop.f32.mrf.mxu0
    %v848 = vadd.f32 0.0, %v847
    %v849 = vpop.f32.mrf.mxu0
    %v850 = vadd.f32 0.0, %v849
    %v851 = vpop.f32.mrf.mxu0
    %v852 = vadd.f32 0.0, %v851
    %853 = vdwg.mxu0
    %854 = vmatprep.subr.bf16.mxu0 %v542
    %855 = vmatpush1.bf16.msra.mxu0 %v541
    %856 = vmatprep.subr.bf16.mxu0 %v530
    %857 = vmatpush1.bf16.msra.mxu0 %v529
    %858 = vmatprep.subr.bf16.mxu0 %v518
    %859 = vmatpush1.bf16.msra.mxu0 %v517
    %860 = vmatprep.subr.bf16.mxu0 %v506
    %861 = vmatpush1.bf16.msra.mxu0 %v505
    %862 = vmatprep.subr.bf16.mxu0 %v494
    %863 = vmatpush1.bf16.msra.mxu0 %v493
    %864 = vmatprep.subr.bf16.mxu0 %v482
    %865 = vmatpush1.bf16.msra.mxu0 %v481
    %866 = vmatprep.subr.bf16.mxu0 %v470
    %867 = vmatpush1.bf16.msra.mxu0 %v469
    %868 = vmatprep.subr.bf16.mxu0 %v458
    %869 = vmatpush1.bf16.msra.mxu0 %v457
    %870 = vmatprep.subr.bf16.mxu0 0
    %871 = vmatpush2.bf16.msra.mxu0 0
    %872 = vmatprep.subr.bf16.mxu0 0
    %873 = vmatpush2.bf16.msra.mxu0 0
    %874 = vmatprep.subr.bf16.mxu0 0
    %875 = vmatpush2.bf16.msra.mxu0 0
    %876 = vmatprep.subr.bf16.mxu0 0
    %877 = vmatpush2.bf16.msra.mxu0 0
    %878 = vmatprep.subr.bf16.mxu0 0
    %879 = vmatpush2.bf16.msra.mxu0 0
    %880 = vmatprep.subr.bf16.mxu0 0
    %881 = vmatpush2.bf16.msra.mxu0 0
    %882 = vmatprep.subr.bf16.mxu0 0
    %883 = vmatpush2.bf16.msra.mxu0 0
    %884 = vmatprep.subr.bf16.mxu0 0
    %885 = vmatpush2.bf16.msra.mxu0 0
    %886 = vmatprep.mubr.bf16.mxu0 0
    %887 = vmatmul.mubr.bf16.gmra.mxu0 %v62
    %v888 = vpop.f32.mrf.mxu0
    %v889 = vadd.f32 0.0, %v888
    %v890 = vpop.f32.mrf.mxu0
    %v891 = vadd.f32 0.0, %v890
    %v892 = vpop.f32.mrf.mxu0
    %v893 = vadd.f32 0.0, %v892
    %v894 = vpop.f32.mrf.mxu0
    %v895 = vadd.f32 0.0, %v894
    %896 = vdwg.mxu0
    %v897 = vld [vmem:[#allocation7] sm:$0xf]
    %v898 = vld [vmem:[#allocation7 + $0x4] sm:$0xf]
    %v899 = vld [vmem:[#allocation7 + $0x8] sm:$0xf]
    %v900 = vld [vmem:[#allocation7 + $0xc] sm:$0xf]
    %v901 = vld [vmem:[#allocation7 + $0x10] sm:$0xf]
    %v902 = vld [vmem:[#allocation7 + $0x14] sm:$0xf]
    %v903 = vld [vmem:[#allocation7 + $0x18] sm:$0xf]
    %v904 = vld [vmem:[#allocation7 + $0x1c] sm:$0xf]
    %v905 = vld [vmem:[#allocation7 + $0x20] sm:$0xf]
    %v906 = vld [vmem:[#allocation7 + $0x24] sm:$0xf]
    %v907 = vld [vmem:[#allocation7 + $0x28] sm:$0xf]
    %v908 = vld [vmem:[#allocation7 + $0x2c] sm:$0xf]
    %v909 = vld [vmem:[#allocation7 + $0x30] sm:$0xf]
    %v910 = vld [vmem:[#allocation7 + $0x34] sm:$0xf]
    %v911 = vld [vmem:[#allocation7 + $0x38] sm:$0xf]
    %v912 = vld [vmem:[#allocation7 + $0x3c] sm:$0xf]
    %v913 = vld [vmem:[#allocation7 + $0x40] sm:$0xf]
    %v914 = vld [vmem:[#allocation7 + $0x44] sm:$0xf]
    %v915 = vld [vmem:[#allocation7 + $0x48] sm:$0xf]
    %v916 = vld [vmem:[#allocation7 + $0x4c] sm:$0xf]
    %v917 = vld [vmem:[#allocation7 + $0x50] sm:$0xf]
    %v918 = vld [vmem:[#allocation7 + $0x54] sm:$0xf]
    %v919 = vld [vmem:[#allocation7 + $0x58] sm:$0xf]
    %v920 = vld [vmem:[#allocation7 + $0x5c] sm:$0xf]
    %v921 = vld [vmem:[#allocation7 + $0x60] sm:$0xf]
    %v922 = vld [vmem:[#allocation7 + $0x64] sm:$0xf]
    %v923 = vld [vmem:[#allocation7 + $0x68] sm:$0xf]
    %v924 = vld [vmem:[#allocation7 + $0x6c] sm:$0xf]
    %v925 = vld [vmem:[#allocation7 + $0x70] sm:$0xf]
    %v926 = vld [vmem:[#allocation7 + $0x74] sm:$0xf]
    %v927 = vld [vmem:[#allocation7 + $0x78] sm:$0xf]
    %v928 = vld [vmem:[#allocation7 + $0x7c] sm:$0xf]
    %v929 = vld [vmem:[#allocation7 + $0x80] sm:$0xf]
    %v930 = vld [vmem:[#allocation7 + $0x84] sm:$0xf]
    %v931 = vld [vmem:[#allocation7 + $0x88] sm:$0xf]
    %v932 = vld [vmem:[#allocation7 + $0x8c] sm:$0xf]
    %v933 = vld [vmem:[#allocation7 + $0x90] sm:$0xf]
    %v934 = vld [vmem:[#allocation7 + $0x94] sm:$0xf]
    %v935 = vld [vmem:[#allocation7 + $0x98] sm:$0xf]
    %v936 = vld [vmem:[#allocation7 + $0x9c] sm:$0xf]
    %v937 = vld [vmem:[#allocation7 + $0xa0] sm:$0xf]
    %v938 = vld [vmem:[#allocation7 + $0xa4] sm:$0xf]
    %v939 = vld [vmem:[#allocation7 + $0xa8] sm:$0xf]
    %v940 = vld [vmem:[#allocation7 + $0xac] sm:$0xf]
    %v941 = vld [vmem:[#allocation7 + $0xb0] sm:$0xf]
    %v942 = vld [vmem:[#allocation7 + $0xb4] sm:$0xf]
    %v943 = vld [vmem:[#allocation7 + $0xb8] sm:$0xf]
    %v944 = vld [vmem:[#allocation7 + $0xbc] sm:$0xf]
    %v945 = vld [vmem:[#allocation7 + $0xc0] sm:$0xf]
    %v946 = vld [vmem:[#allocation7 + $0xc4] sm:$0xf]
    %v947 = vld [vmem:[#allocation7 + $0xc8] sm:$0xf]
    %v948 = vld [vmem:[#allocation7 + $0xcc] sm:$0xf]
    %v949 = vld [vmem:[#allocation7 + $0xd0] sm:$0xf]
    %v950 = vld [vmem:[#allocation7 + $0xd4] sm:$0xf]
    %v951 = vld [vmem:[#allocation7 + $0xd8] sm:$0xf]
    %v952 = vld [vmem:[#allocation7 + $0xdc] sm:$0xf]
    %v953 = vld [vmem:[#allocation7 + $0xe0] sm:$0xf]
    %v954 = vld [vmem:[#allocation7 + $0xe4] sm:$0xf]
    %v955 = vld [vmem:[#allocation7 + $0xe8] sm:$0xf]
    %v956 = vld [vmem:[#allocation7 + $0xec] sm:$0xf]
    %v957 = vld [vmem:[#allocation7 + $0xf0] sm:$0xf]
    %v958 = vld [vmem:[#allocation7 + $0xf4] sm:$0xf]
    %v959 = vld [vmem:[#allocation7 + $0xf8] sm:$0xf]
    %v960 = vld [vmem:[#allocation7 + $0xfc] sm:$0xf]
    %v961 = vpack.c.bf16 %v674, %v674
    %v962 = vpack.c.bf16 %v678, %v678
    %v963 = vpack.c.bf16 %v760, %v760
    %v964 = vpack.c.bf16 %v764, %v764
    %v965 = vpack.c.bf16 %v846, %v846
    %v966 = vpack.c.bf16 %v850, %v850
    %967 = vmatprep.subr.bf16.mxu0 0
    %968 = vmatpush1.bf16.xpose.msra.mxu0 0
    %969 = vmatprep.subr.bf16.mxu0 0
    %970 = vmatpush1.bf16.xpose.msra.mxu0 0
    %971 = vmatprep.subr.bf16.mxu0 0
    %972 = vmatpush1.bf16.xpose.msra.mxu0 0
    %973 = vmatprep.subr.bf16.mxu0 0
    %974 = vmatpush1.bf16.xpose.msra.mxu0 0
    %975 = vmatprep.subr.bf16.mxu0 0
    %976 = vmatpush1.bf16.xpose.msra.mxu0 0
    %977 = vmatprep.subr.bf16.mxu0 0
    %978 = vmatpush1.bf16.xpose.msra.mxu0 0
    %979 = vmatprep.subr.bf16.mxu0 0
    %980 = vmatpush1.bf16.xpose.msra.mxu0 0
    %981 = vmatprep.subr.bf16.mxu0 0
    %982 = vmatpush1.bf16.xpose.msra.mxu0 %v963
    %983 = vmatprep.subr.bf16.mxu0 0
    %984 = vmatpush2.bf16.xpose.msra.mxu0 0
    %985 = vmatprep.subr.bf16.mxu0 0
    %986 = vmatpush2.bf16.xpose.msra.mxu0 0
    %987 = vmatprep.subr.bf16.mxu0 0
    %988 = vmatpush2.bf16.xpose.msra.mxu0 0
    %989 = vmatprep.subr.bf16.mxu0 0
    %990 = vmatpush2.bf16.xpose.msra.mxu0 0
    %991 = vmatprep.subr.bf16.mxu0 0
    %992 = vmatpush2.bf16.xpose.msra.mxu0 0
    %993 = vmatprep.subr.bf16.mxu0 0
    %994 = vmatpush2.bf16.xpose.msra.mxu0 0
    %995 = vmatprep.subr.bf16.mxu0 0
    %996 = vmatpush2.bf16.xpose.msra.mxu0 0
    %997 = vmatprep.subr.bf16.mxu0 0
    %998 = vmatpush2.bf16.xpose.msra.mxu0 0
    %999 = vmatprep.mubr.bf16.mxu0 0
    %1000 = vmatmul.mubr.bf16.gmra.mxu0 %v961
    %v1001 = vpop.f32.mrf.mxu0
    %v1002 = vadd.f32 0.0, %v1001
    %v1003 = vpop.f32.mrf.mxu0
    %v1004 = vpop.f32.mrf.mxu0
    %v1005 = vpop.f32.mrf.mxu0
    %1006 = vdwg.mxu0
    %1007 = vmatprep.subr.bf16.mxu0 0
    %1008 = vmatpush1.bf16.xpose.msra.mxu0 0
    %1009 = vmatprep.subr.bf16.mxu0 0
    %1010 = vmatpush1.bf16.xpose.msra.mxu0 0
    %1011 = vmatprep.subr.bf16.mxu0 0
    %1012 = vmatpush1.bf16.xpose.msra.mxu0 0
    %1013 = vmatprep.subr.bf16.mxu0 0
    %1014 = vmatpush1.bf16.xpose.msra.mxu0 0
    %1015 = vmatprep.subr.bf16.mxu0 0
    %1016 = vmatpush1.bf16.xpose.msra.mxu0 0
    %1017 = vmatprep.subr.bf16.mxu0 0
    %1018 = vmatpush1.bf16.xpose.msra.mxu0 0
    %1019 = vmatprep.subr.bf16.mxu0 0
    %1020 = vmatpush1.bf16.xpose.msra.mxu0 0
    %1021 = vmatprep.subr.bf16.mxu0 0
    %1022 = vmatpush1.bf16.xpose.msra.mxu0 %v964
    %1023 = vmatprep.subr.bf16.mxu0 0
    %1024 = vmatpush2.bf16.xpose.msra.mxu0 0
    %1025 = vmatprep.subr.bf16.mxu0 0
    %1026 = vmatpush2.bf16.xpose.msra.mxu0 0
    %1027 = vmatprep.subr.bf16.mxu0 0
    %1028 = vmatpush2.bf16.xpose.msra.mxu0 0
    %1029 = vmatprep.subr.bf16.mxu0 0
    %1030 = vmatpush2.bf16.xpose.msra.mxu0 0
    %1031 = vmatprep.subr.bf16.mxu0 0
    %1032 = vmatpush2.bf16.xpose.msra.mxu0 0
    %1033 = vmatprep.subr.bf16.mxu0 0
    %1034 = vmatpush2.bf16.xpose.msra.mxu0 0
    %1035 = vmatprep.subr.bf16.mxu0 0
    %1036 = vmatpush2.bf16.xpose.msra.mxu0 0
    %1037 = vmatprep.subr.bf16.mxu0 0
    %1038 = vmatpush2.bf16.xpose.msra.mxu0 0
    %1039 = vmatprep.mubr.bf16.mxu0 0
    %1040 = vmatmul.mubr.bf16.gmra.mxu0 %v962
    %v1041 = vpop.f32.mrf.mxu0
    %v1042 = vadd.f32 0.0, %v1041
    %v1043 = vpop.f32.mrf.mxu0
    %v1044 = vpop.f32.mrf.mxu0
    %v1045 = vpop.f32.mrf.mxu0
    %1046 = vdwg.mxu0
    %vm1047 = vcmask 64512
    %v1048 = vsel %vm1047, %v1002, -inf
    %1049 = vmax.xlane.f32.xlu0 %v1048
    %v1050 = vpop.xlane.xlu0 %1049
    %v1051 = vsel %vm1047, %v1042, -inf
    %1052 = vmax.xlane.f32.xlu0 %v1051
    %v1053 = vpop.xlane.xlu0 %1052
    %v1054 = vsub.f32 %v1002, %v1050
    %v1055 = vsub.f32 %v1042, %v1053
    %v1056 = vmul.f32 %v1054, 1.442695
    %v1057 = vpow.pop %v1056
    %v1058 = vmul.f32 %v1055, 1.442695
    %v1059 = vpow.pop %v1058
    %v1060 = vsel %vm1047, %v1057, 0.0
    %1061 = vadd.xlane.f32.xlu0 %v1060
    %v1062 = vpop.xlane.xlu0 %1061
    %v1063 = vsel %vm1047, %v1059, 0.0
    %1064 = vadd.xlane.f32.xlu0 %v1063
    %v1065 = vpop.xlane.xlu0 %1064
    %v1066 = vrcp.pop %v1062
    %v1067 = vrcp.pop %v1065
    %v1068 = vpack.c.bf16 %v1057, %v1057
    %v1069 = vpack.c.bf16 %v1059, %v1059
    %v1071 = vsel %vm1047, %v1068, 0
    %vm1073 = vcmask 1043456
    %v1075 = vsel %vm1073, %v965, 0
    %1077 = vmatprep.subr.bf16.mxu0 0
    %1078 = vmatpush1.bf16.msra.mxu0 0
    %1079 = vmatprep.subr.bf16.mxu0 0
    %1080 = vmatpush1.bf16.msra.mxu0 0
    %1081 = vmatprep.subr.bf16.mxu0 0
    %1082 = vmatpush1.bf16.msra.mxu0 0
    %1083 = vmatprep.subr.bf16.mxu0 0
    %1084 = vmatpush1.bf16.msra.mxu0 0
    %1085 = vmatprep.subr.bf16.mxu0 0
    %1086 = vmatpush1.bf16.msra.mxu0 0
    %1087 = vmatprep.subr.bf16.mxu0 0
    %1088 = vmatpush1.bf16.msra.mxu0 0
    %1089 = vmatprep.subr.bf16.mxu0 0
    %1090 = vmatpush1.bf16.msra.mxu0 0
    %1091 = vmatprep.subr.bf16.mxu0 0
    %1092 = vmatpush1.bf16.msra.mxu0 %v1075
    %1093 = vmatprep.subr.bf16.mxu0 0
    %1094 = vmatpush2.bf16.msra.mxu0 0
    %1095 = vmatprep.subr.bf16.mxu0 0
    %1096 = vmatpush2.bf16.msra.mxu0 0
    %1097 = vmatprep.subr.bf16.mxu0 0
    %1098 = vmatpush2.bf16.msra.mxu0 0
    %1099 = vmatprep.subr.bf16.mxu0 0
    %1100 = vmatpush2.bf16.msra.mxu0 0
    %1101 = vmatprep.subr.bf16.mxu0 0
    %1102 = vmatpush2.bf16.msra.mxu0 0
    %1103 = vmatprep.subr.bf16.mxu0 0
    %1104 = vmatpush2.bf16.msra.mxu0 0
    %1105 = vmatprep.subr.bf16.mxu0 0
    %1106 = vmatpush2.bf16.msra.mxu0 0
    %1107 = vmatprep.subr.bf16.mxu0 0
    %1108 = vmatpush2.bf16.msra.mxu0 0
    %1109 = vmatprep.mubr.bf16.mxu0 0
    %1110 = vmatmul.mubr.bf16.gmra.mxu0 %v1071
    %v1111 = vpop.f32.mrf.mxu0
    %v1112 = vadd.f32 0.0, %v1111
    %v1113 = vpop.f32.mrf.mxu0
    %v1114 = vpop.f32.mrf.mxu0
    %v1115 = vpop.f32.mrf.mxu0
    %1116 = vdwg.mxu0
    %v1118 = vsel %vm1047, %v1069, 0
    %v1121 = vsel %vm1073, %v966, 0
    %1123 = vmatprep.subr.bf16.mxu0 0
    %1124 = vmatpush1.bf16.msra.mxu0 0
    %1125 = vmatprep.subr.bf16.mxu0 0
    %1126 = vmatpush1.bf16.msra.mxu0 0
    %1127 = vmatprep.subr.bf16.mxu0 0
    %1128 = vmatpush1.bf16.msra.mxu0 0
    %1129 = vmatprep.subr.bf16.mxu0 0
    %1130 = vmatpush1.bf16.msra.mxu0 0
    %1131 = vmatprep.subr.bf16.mxu0 0
    %1132 = vmatpush1.bf16.msra.mxu0 0
    %1133 = vmatprep.subr.bf16.mxu0 0
    %1134 = vmatpush1.bf16.msra.mxu0 0
    %1135 = vmatprep.subr.bf16.mxu0 0
    %1136 = vmatpush1.bf16.msra.mxu0 0
    %1137 = vmatprep.subr.bf16.mxu0 0
    %1138 = vmatpush1.bf16.msra.mxu0 %v1121
    %1139 = vmatprep.subr.bf16.mxu0 0
    %1140 = vmatpush2.bf16.msra.mxu0 0
    %1141 = vmatprep.subr.bf16.mxu0 0
    %1142 = vmatpush2.bf16.msra.mxu0 0
    %1143 = vmatprep.subr.bf16.mxu0 0
    %1144 = vmatpush2.bf16.msra.mxu0 0
    %1145 = vmatprep.subr.bf16.mxu0 0
    %1146 = vmatpush2.bf16.msra.mxu0 0
    %1147 = vmatprep.subr.bf16.mxu0 0
    %1148 = vmatpush2.bf16.msra.mxu0 0
    %1149 = vmatprep.subr.bf16.mxu0 0
    %1150 = vmatpush2.bf16.msra.mxu0 0
    %1151 = vmatprep.subr.bf16.mxu0 0
    %1152 = vmatpush2.bf16.msra.mxu0 0
    %1153 = vmatprep.subr.bf16.mxu0 0
    %1154 = vmatpush2.bf16.msra.mxu0 0
    %1155 = vmatprep.mubr.bf16.mxu0 0
    %1156 = vmatmul.mubr.bf16.gmra.mxu0 %v1118
    %v1157 = vpop.f32.mrf.mxu0
    %v1158 = vadd.f32 0.0, %v1157
    %v1159 = vpop.f32.mrf.mxu0
    %v1160 = vpop.f32.mrf.mxu0
    %v1161 = vpop.f32.mrf.mxu0
    %1162 = vdwg.mxu0
    %v1163 = vmul.f32 %v1112, %v1066
    %v1164 = vmul.f32 %v1158, %v1067
    %v1165 = vpack.c.bf16 %v1164, %v1163
    %v1166 = vpack.c.bf16 %v676, %v676
    %v1167 = vpack.c.bf16 %v680, %v680
    %v1168 = vpack.c.bf16 %v762, %v762
    %v1169 = vpack.c.bf16 %v766, %v766
    %v1170 = vpack.c.bf16 %v848, %v848
    %v1171 = vpack.c.bf16 %v852, %v852
    %1172 = vmatprep.subr.bf16.mxu0 0
    %1173 = vmatpush1.bf16.xpose.msra.mxu0 0
    %1174 = vmatprep.subr.bf16.mxu0 0
    %1175 = vmatpush1.bf16.xpose.msra.mxu0 0
    %1176 = vmatprep.subr.bf16.mxu0 0
    %1177 = vmatpush1.bf16.xpose.msra.mxu0 0
    %1178 = vmatprep.subr.bf16.mxu0 0
    %1179 = vmatpush1.bf16.xpose.msra.mxu0 0
    %1180 = vmatprep.subr.bf16.mxu0 0
    %1181 = vmatpush1.bf16.xpose.msra.mxu0 0
    %1182 = vmatprep.subr.bf16.mxu0 0
    %1183 = vmatpush1.bf16.xpose.msra.mxu0 0
    %1184 = vmatprep.subr.bf16.mxu0 0
    %1185 = vmatpush1.bf16.xpose.msra.mxu0 0
    %1186 = vmatprep.subr.bf16.mxu0 0
    %1187 = vmatpush1.bf16.xpose.msra.mxu0 %v1168
    %1188 = vmatprep.subr.bf16.mxu0 0
    %1189 = vmatpush2.bf16.xpose.msra.mxu0 0
    %1190 = vmatprep.subr.bf16.mxu0 0
    %1191 = vmatpush2.bf16.xpose.msra.mxu0 0
    %1192 = vmatprep.subr.bf16.mxu0 0
    %1193 = vmatpush2.bf16.xpose.msra.mxu0 0
    %1194 = vmatprep.subr.bf16.mxu0 0
    %1195 = vmatpush2.bf16.xpose.msra.mxu0 0
    %1196 = vmatprep.subr.bf16.mxu0 0
    %1197 = vmatpush2.bf16.xpose.msra.mxu0 0
    %1198 = vmatprep.subr.bf16.mxu0 0
    %1199 = vmatpush2.bf16.xpose.msra.mxu0 0
    %1200 = vmatprep.subr.bf16.mxu0 0
    %1201 = vmatpush2.bf16.xpose.msra.mxu0 0
    %1202 = vmatprep.subr.bf16.mxu0 0
    %1203 = vmatpush2.bf16.xpose.msra.mxu0 0
    %1204 = vmatprep.mubr.bf16.mxu0 0
    %1205 = vmatmul.mubr.bf16.gmra.mxu0 %v1166
    %v1206 = vpop.f32.mrf.mxu0
    %v1207 = vadd.f32 0.0, %v1206
    %v1208 = vpop.f32.mrf.mxu0
    %v1209 = vpop.f32.mrf.mxu0
    %v1210 = vpop.f32.mrf.mxu0
    %1211 = vdwg.mxu0
    %1212 = vmatprep.subr.bf16.mxu0 0
    %1213 = vmatpush1.bf16.xpose.msra.mxu0 0
    %1214 = vmatprep.subr.bf16.mxu0 0
    %1215 = vmatpush1.bf16.xpose.msra.mxu0 0
    %1216 = vmatprep.subr.bf16.mxu0 0
    %1217 = vmatpush1.bf16.xpose.msra.mxu0 0
    %1218 = vmatprep.subr.bf16.mxu0 0
    %1219 = vmatpush1.bf16.xpose.msra.mxu0 0
    %1220 = vmatprep.subr.bf16.mxu0 0
    %1221 = vmatpush1.bf16.xpose.msra.mxu0 0
    %1222 = vmatprep.subr.bf16.mxu0 0
    %1223 = vmatpush1.bf16.xpose.msra.mxu0 0
    %1224 = vmatprep.subr.bf16.mxu0 0
    %1225 = vmatpush1.bf16.xpose.msra.mxu0 0
    %1226 = vmatprep.subr.bf16.mxu0 0
    %1227 = vmatpush1.bf16.xpose.msra.mxu0 %v1169
    %1228 = vmatprep.subr.bf16.mxu0 0
    %1229 = vmatpush2.bf16.xpose.msra.mxu0 0
    %1230 = vmatprep.subr.bf16.mxu0 0
    %1231 = vmatpush2.bf16.xpose.msra.mxu0 0
    %1232 = vmatprep.subr.bf16.mxu0 0
    %1233 = vmatpush2.bf16.xpose.msra.mxu0 0
    %1234 = vmatprep.subr.bf16.mxu0 0
    %1235 = vmatpush2.bf16.xpose.msra.mxu0 0
    %1236 = vmatprep.subr.bf16.mxu0 0
    %1237 = vmatpush2.bf16.xpose.msra.mxu0 0
    %1238 = vmatprep.subr.bf16.mxu0 0
    %1239 = vmatpush2.bf16.xpose.msra.mxu0 0
    %1240 = vmatprep.subr.bf16.mxu0 0
    %1241 = vmatpush2.bf16.xpose.msra.mxu0 0
    %1242 = vmatprep.subr.bf16.mxu0 0
    %1243 = vmatpush2.bf16.xpose.msra.mxu0 0
    %1244 = vmatprep.mubr.bf16.mxu0 0
    %1245 = vmatmul.mubr.bf16.gmra.mxu0 %v1167
    %v1246 = vpop.f32.mrf.mxu0
    %v1247 = vadd.f32 0.0, %v1246
    %v1248 = vpop.f32.mrf.mxu0
    %v1249 = vpop.f32.mrf.mxu0
    %v1250 = vpop.f32.mrf.mxu0
    %1251 = vdwg.mxu0
    %v1252 = vsel %vm1047, %v1207, -inf
    %1253 = vmax.xlane.f32.xlu0 %v1252
    %v1254 = vpop.xlane.xlu0 %1253
    %v1255 = vsel %vm1047, %v1247, -inf
    %1256 = vmax.xlane.f32.xlu0 %v1255
    %v1257 = vpop.xlane.xlu0 %1256
    %v1258 = vsub.f32 %v1207, %v1254
    %v1259 = vsub.f32 %v1247, %v1257
    %v1260 = vmul.f32 %v1258, 1.442695
    %v1261 = vpow.pop %v1260
    %v1262 = vmul.f32 %v1259, 1.442695
    %v1263 = vpow.pop %v1262
    %v1264 = vsel %vm1047, %v1261, 0.0
    %1265 = vadd.xlane.f32.xlu0 %v1264
    %v1266 = vpop.xlane.xlu0 %1265
    %v1267 = vsel %vm1047, %v1263, 0.0
    %1268 = vadd.xlane.f32.xlu0 %v1267
    %v1269 = vpop.xlane.xlu0 %1268
    %v1270 = vrcp.pop %v1266
    %v1271 = vrcp.pop %v1269
    %v1272 = vpack.c.bf16 %v1261, %v1261
    %v1273 = vpack.c.bf16 %v1263, %v1263
    %v1275 = vsel %vm1047, %v1272, 0
    %v1278 = vsel %vm1073, %v1170, 0
    %1280 = vmatprep.subr.bf16.mxu0 0
    %1281 = vmatpush1.bf16.msra.mxu0 0
    %1282 = vmatprep.subr.bf16.mxu0 0
    %1283 = vmatpush1.bf16.msra.mxu0 0
    %1284 = vmatprep.subr.bf16.mxu0 0
    %1285 = vmatpush1.bf16.msra.mxu0 0
    %1286 = vmatprep.subr.bf16.mxu0 0
    %1287 = vmatpush1.bf16.msra.mxu0 0
    %1288 = vmatprep.subr.bf16.mxu0 0
    %1289 = vmatpush1.bf16.msra.mxu0 0
    %1290 = vmatprep.subr.bf16.mxu0 0
    %1291 = vmatpush1.bf16.msra.mxu0 0
    %1292 = vmatprep.subr.bf16.mxu0 0
    %1293 = vmatpush1.bf16.msra.mxu0 0
    %1294 = vmatprep.subr.bf16.mxu0 0
    %1295 = vmatpush1.bf16.msra.mxu0 %v1278
    %1296 = vmatprep.subr.bf16.mxu0 0
    %1297 = vmatpush2.bf16.msra.mxu0 0
    %1298 = vmatprep.subr.bf16.mxu0 0
    %1299 = vmatpush2.bf16.msra.mxu0 0
    %1300 = vmatprep.subr.bf16.mxu0 0
    %1301 = vmatpush2.bf16.msra.mxu0 0
    %1302 = vmatprep.subr.bf16.mxu0 0
    %1303 = vmatpush2.bf16.msra.mxu0 0
    %1304 = vmatprep.subr.bf16.mxu0 0
    %1305 = vmatpush2.bf16.msra.mxu0 0
    %1306 = vmatprep.subr.bf16.mxu0 0
    %1307 = vmatpush2.bf16.msra.mxu0 0
    %1308 = vmatprep.subr.bf16.mxu0 0
    %1309 = vmatpush2.bf16.msra.mxu0 0
    %1310 = vmatprep.subr.bf16.mxu0 0
    %1311 = vmatpush2.bf16.msra.mxu0 0
    %1312 = vmatprep.mubr.bf16.mxu0 0
    %1313 = vmatmul.mubr.bf16.gmra.mxu0 %v1275
    %v1314 = vpop.f32.mrf.mxu0
    %v1315 = vadd.f32 0.0, %v1314
    %v1316 = vpop.f32.mrf.mxu0
    %v1317 = vpop.f32.mrf.mxu0
    %v1318 = vpop.f32.mrf.mxu0
    %1319 = vdwg.mxu0
    %v1321 = vsel %vm1047, %v1273, 0
    %v1324 = vsel %vm1073, %v1171, 0
    %1326 = vmatprep.subr.bf16.mxu0 0
    %1327 = vmatpush1.bf16.msra.mxu0 0
    %1328 = vmatprep.subr.bf16.mxu0 0
    %1329 = vmatpush1.bf16.msra.mxu0 0
    %1330 = vmatprep.subr.bf16.mxu0 0
    %1331 = vmatpush1.bf16.msra.mxu0 0
    %1332 = vmatprep.subr.bf16.mxu0 0
    %1333 = vmatpush1.bf16.msra.mxu0 0
    %1334 = vmatprep.subr.bf16.mxu0 0
    %1335 = vmatpush1.bf16.msra.mxu0 0
    %1336 = vmatprep.subr.bf16.mxu0 0
    %1337 = vmatpush1.bf16.msra.mxu0 0
    %1338 = vmatprep.subr.bf16.mxu0 0
    %1339 = vmatpush1.bf16.msra.mxu0 0
    %1340 = vmatprep.subr.bf16.mxu0 0
    %1341 = vmatpush1.bf16.msra.mxu0 %v1324
    %1342 = vmatprep.subr.bf16.mxu0 0
    %1343 = vmatpush2.bf16.msra.mxu0 0
    %1344 = vmatprep.subr.bf16.mxu0 0
    %1345 = vmatpush2.bf16.msra.mxu0 0
    %1346 = vmatprep.subr.bf16.mxu0 0
    %1347 = vmatpush2.bf16.msra.mxu0 0
    %1348 = vmatprep.subr.bf16.mxu0 0
    %1349 = vmatpush2.bf16.msra.mxu0 0
    %1350 = vmatprep.subr.bf16.mxu0 0
    %1351 = vmatpush2.bf16.msra.mxu0 0
    %1352 = vmatprep.subr.bf16.mxu0 0
    %1353 = vmatpush2.bf16.msra.mxu0 0
    %1354 = vmatprep.subr.bf16.mxu0 0
    %1355 = vmatpush2.bf16.msra.mxu0 0
    %1356 = vmatprep.subr.bf16.mxu0 0
    %1357 = vmatpush2.bf16.msra.mxu0 0
    %1358 = vmatprep.mubr.bf16.mxu0 0
    %1359 = vmatmul.mubr.bf16.gmra.mxu0 %v1321
    %v1360 = vpop.f32.mrf.mxu0
    %v1361 = vadd.f32 0.0, %v1360
    %v1362 = vpop.f32.mrf.mxu0
    %v1363 = vpop.f32.mrf.mxu0
    %v1364 = vpop.f32.mrf.mxu0
    %1365 = vdwg.mxu0
    %v1366 = vmul.f32 %v1315, %v1270
    %v1367 = vmul.f32 %v1361, %v1271
    %v1368 = vpack.c.bf16 %v1367, %v1366
    %v1385 = vunpack.c.l.b16 %v913
    %v1386 = vunpack.c.l.b16 %v914
    %v1387 = vunpack.c.l.b16 %v915
    %v1388 = vunpack.c.l.b16 %v916
    %v1389 = vunpack.c.l.b16 %v917
    %v1390 = vunpack.c.l.b16 %v918
    %v1391 = vunpack.c.l.b16 %v919
    %v1392 = vunpack.c.l.b16 %v920
    %v1393 = vunpack.c.l.b16 %v921
    %v1394 = vunpack.c.l.b16 %v922
    %v1395 = vunpack.c.l.b16 %v923
    %v1396 = vunpack.c.l.b16 %v924
    %v1397 = vunpack.c.l.b16 %v925
    %v1398 = vunpack.c.l.b16 %v926
    %v1399 = vunpack.c.l.b16 %v927
    %v1400 = vunpack.c.l.b16 %v928
    %v1401 = vpack.c.b16 %v1386, %v1385
    %v1402 = vpack.c.b16 %v1388, %v1387
    %v1403 = vpack.c.b16 %v1390, %v1389
    %v1404 = vpack.c.b16 %v1392, %v1391
    %v1405 = vpack.c.b16 %v1394, %v1393
    %v1406 = vpack.c.b16 %v1396, %v1395
    %v1407 = vpack.c.b16 %v1398, %v1397
    %v1408 = vpack.c.b16 %v1400, %v1399
    %1417 = vmatprep.subr.bf16.mxu0 0
    %1418 = vmatpush1.bf16.msra.mxu0 %v1408
    %1419 = vmatprep.subr.bf16.mxu0 0
    %1420 = vmatpush1.bf16.msra.mxu0 %v1407
    %1421 = vmatprep.subr.bf16.mxu0 0
    %1422 = vmatpush1.bf16.msra.mxu0 %v1406
    %1423 = vmatprep.subr.bf16.mxu0 0
    %1424 = vmatpush1.bf16.msra.mxu0 %v1405
    %1425 = vmatprep.subr.bf16.mxu0 0
    %1426 = vmatpush1.bf16.msra.mxu0 %v1404
    %1427 = vmatprep.subr.bf16.mxu0 0
    %1428 = vmatpush1.bf16.msra.mxu0 %v1403
    %1429 = vmatprep.subr.bf16.mxu0 0
    %1430 = vmatpush1.bf16.msra.mxu0 %v1402
    %1431 = vmatprep.subr.bf16.mxu0 0
    %1432 = vmatpush1.bf16.msra.mxu0 %v1401
    %1433 = vmatprep.subr.bf16.mxu0 0
    %1434 = vmatpush2.bf16.msra.mxu0 0
    %1435 = vmatprep.subr.bf16.mxu0 0
    %1436 = vmatpush2.bf16.msra.mxu0 0
    %1437 = vmatprep.subr.bf16.mxu0 0
    %1438 = vmatpush2.bf16.msra.mxu0 0
    %1439 = vmatprep.subr.bf16.mxu0 0
    %1440 = vmatpush2.bf16.msra.mxu0 0
    %1441 = vmatprep.subr.bf16.mxu0 0
    %1442 = vmatpush2.bf16.msra.mxu0 0
    %1443 = vmatprep.subr.bf16.mxu0 0
    %1444 = vmatpush2.bf16.msra.mxu0 0
    %1445 = vmatprep.subr.bf16.mxu0 0
    %1446 = vmatpush2.bf16.msra.mxu0 0
    %1447 = vmatprep.subr.bf16.mxu0 0
    %1448 = vmatpush2.bf16.msra.mxu0 0
    %1449 = vmatprep.mubr.bf16.mxu0 0
    %1450 = vmatmul.mubr.bf16.gmra.mxu0 %v1368
    %v1451 = vpop.f32.mrf.mxu0
    %v1452 = vadd.f32 0.0, %v1451
    %v1453 = vpop.f32.mrf.mxu0
    %v1454 = vpop.f32.mrf.mxu0
    %v1455 = vadd.f32 0.0, %v1454
    %v1456 = vpop.f32.mrf.mxu0
    %1457 = vdwg.mxu0
    %v1474 = vunpack.c.l.b16 %v897
    %v1475 = vunpack.c.l.b16 %v898
    %v1476 = vunpack.c.l.b16 %v899
    %v1477 = vunpack.c.l.b16 %v900
    %v1478 = vunpack.c.l.b16 %v901
    %v1479 = vunpack.c.l.b16 %v902
    %v1480 = vunpack.c.l.b16 %v903
    %v1481 = vunpack.c.l.b16 %v904
    %v1482 = vunpack.c.l.b16 %v905
    %v1483 = vunpack.c.l.b16 %v906
    %v1484 = vunpack.c.l.b16 %v907
    %v1485 = vunpack.c.l.b16 %v908
    %v1486 = vunpack.c.l.b16 %v909
    %v1487 = vunpack.c.l.b16 %v910
    %v1488 = vunpack.c.l.b16 %v911
    %v1489 = vunpack.c.l.b16 %v912
    %v1490 = vpack.c.b16 %v1475, %v1474
    %v1491 = vpack.c.b16 %v1477, %v1476
    %v1492 = vpack.c.b16 %v1479, %v1478
    %v1493 = vpack.c.b16 %v1481, %v1480
    %v1494 = vpack.c.b16 %v1483, %v1482
    %v1495 = vpack.c.b16 %v1485, %v1484
    %v1496 = vpack.c.b16 %v1487, %v1486
    %v1497 = vpack.c.b16 %v1489, %v1488
    %1506 = vmatprep.subr.bf16.mxu0 0
    %1507 = vmatpush1.bf16.msra.mxu0 %v1497
    %1508 = vmatprep.subr.bf16.mxu0 0
    %1509 = vmatpush1.bf16.msra.mxu0 %v1496
    %1510 = vmatprep.subr.bf16.mxu0 0
    %1511 = vmatpush1.bf16.msra.mxu0 %v1495
    %1512 = vmatprep.subr.bf16.mxu0 0
    %1513 = vmatpush1.bf16.msra.mxu0 %v1494
    %1514 = vmatprep.subr.bf16.mxu0 0
    %1515 = vmatpush1.bf16.msra.mxu0 %v1493
    %1516 = vmatprep.subr.bf16.mxu0 0
    %1517 = vmatpush1.bf16.msra.mxu0 %v1492
    %1518 = vmatprep.subr.bf16.mxu0 0
    %1519 = vmatpush1.bf16.msra.mxu0 %v1491
    %1520 = vmatprep.subr.bf16.mxu0 0
    %1521 = vmatpush1.bf16.msra.mxu0 %v1490
    %1522 = vmatprep.subr.bf16.mxu0 0
    %1523 = vmatpush2.bf16.msra.mxu0 0
    %1524 = vmatprep.subr.bf16.mxu0 0
    %1525 = vmatpush2.bf16.msra.mxu0 0
    %1526 = vmatprep.subr.bf16.mxu0 0
    %1527 = vmatpush2.bf16.msra.mxu0 0
    %1528 = vmatprep.subr.bf16.mxu0 0
    %1529 = vmatpush2.bf16.msra.mxu0 0
    %1530 = vmatprep.subr.bf16.mxu0 0
    %1531 = vmatpush2.bf16.msra.mxu0 0
    %1532 = vmatprep.subr.bf16.mxu0 0
    %1533 = vmatpush2.bf16.msra.mxu0 0
    %1534 = vmatprep.subr.bf16.mxu0 0
    %1535 = vmatpush2.bf16.msra.mxu0 0
    %1536 = vmatprep.subr.bf16.mxu0 0
    %1537 = vmatpush2.bf16.msra.mxu0 0
    %1538 = vmatprep.mubr.bf16.mxu0 0
    %1539 = vmatmul.mubr.bf16.gmra.mxu0 %v1165
    %v1540 = vpop.f32.mrf.mxu0
    %v1541 = vadd.f32 %v1452, %v1540
    %v1542 = vpop.f32.mrf.mxu0
    %v1543 = vpop.f32.mrf.mxu0
    %v1544 = vadd.f32 %v1455, %v1543
    %v1545 = vpop.f32.mrf.mxu0
    %1546 = vdwg.mxu0
    %v1547 = vpack.c.bf16 %v717, %v717
    %v1548 = vpack.c.bf16 %v721, %v721
    %v1549 = vpack.c.bf16 %v803, %v803
    %v1550 = vpack.c.bf16 %v807, %v807
    %v1551 = vpack.c.bf16 %v889, %v889
    %v1552 = vpack.c.bf16 %v893, %v893
    %1553 = vmatprep.subr.bf16.mxu0 0
    %1554 = vmatpush1.bf16.xpose.msra.mxu0 0
    %1555 = vmatprep.subr.bf16.mxu0 0
    %1556 = vmatpush1.bf16.xpose.msra.mxu0 0
    %1557 = vmatprep.subr.bf16.mxu0 0
    %1558 = vmatpush1.bf16.xpose.msra.mxu0 0
    %1559 = vmatprep.subr.bf16.mxu0 0
    %1560 = vmatpush1.bf16.xpose.msra.mxu0 0
    %1561 = vmatprep.subr.bf16.mxu0 0
    %1562 = vmatpush1.bf16.xpose.msra.mxu0 0
    %1563 = vmatprep.subr.bf16.mxu0 0
    %1564 = vmatpush1.bf16.xpose.msra.mxu0 0
    %1565 = vmatprep.subr.bf16.mxu0 0
    %1566 = vmatpush1.bf16.xpose.msra.mxu0 0
    %1567 = vmatprep.subr.bf16.mxu0 0
    %1568 = vmatpush1.bf16.xpose.msra.mxu0 %v1549
    %1569 = vmatprep.subr.bf16.mxu0 0
    %1570 = vmatpush2.bf16.xpose.msra.mxu0 0
    %1571 = vmatprep.subr.bf16.mxu0 0
    %1572 = vmatpush2.bf16.xpose.msra.mxu0 0
    %1573 = vmatprep.subr.bf16.mxu0 0
    %1574 = vmatpush2.bf16.xpose.msra.mxu0 0
    %1575 = vmatprep.subr.bf16.mxu0 0
    %1576 = vmatpush2.bf16.xpose.msra.mxu0 0
    %1577 = vmatprep.subr.bf16.mxu0 0
    %1578 = vmatpush2.bf16.xpose.msra.mxu0 0
    %1579 = vmatprep.subr.bf16.mxu0 0
    %1580 = vmatpush2.bf16.xpose.msra.mxu0 0
    %1581 = vmatprep.subr.bf16.mxu0 0
    %1582 = vmatpush2.bf16.xpose.msra.mxu0 0
    %1583 = vmatprep.subr.bf16.mxu0 0
    %1584 = vmatpush2.bf16.xpose.msra.mxu0 0
    %1585 = vmatprep.mubr.bf16.mxu0 0
    %1586 = vmatmul.mubr.bf16.gmra.mxu0 %v1547
    %v1587 = vpop.f32.mrf.mxu0
    %v1588 = vadd.f32 0.0, %v1587
    %v1589 = vpop.f32.mrf.mxu0
    %v1590 = vpop.f32.mrf.mxu0
    %v1591 = vpop.f32.mrf.mxu0
    %1592 = vdwg.mxu0
    %1593 = vmatprep.subr.bf16.mxu0 0
    %1594 = vmatpush1.bf16.xpose.msra.mxu0 0
    %1595 = vmatprep.subr.bf16.mxu0 0
    %1596 = vmatpush1.bf16.xpose.msra.mxu0 0
    %1597 = vmatprep.subr.bf16.mxu0 0
    %1598 = vmatpush1.bf16.xpose.msra.mxu0 0
    %1599 = vmatprep.subr.bf16.mxu0 0
    %1600 = vmatpush1.bf16.xpose.msra.mxu0 0
    %1601 = vmatprep.subr.bf16.mxu0 0
    %1602 = vmatpush1.bf16.xpose.msra.mxu0 0
    %1603 = vmatprep.subr.bf16.mxu0 0
    %1604 = vmatpush1.bf16.xpose.msra.mxu0 0
    %1605 = vmatprep.subr.bf16.mxu0 0
    %1606 = vmatpush1.bf16.xpose.msra.mxu0 0
    %1607 = vmatprep.subr.bf16.mxu0 0
    %1608 = vmatpush1.bf16.xpose.msra.mxu0 %v1550
    %1609 = vmatprep.subr.bf16.mxu0 0
    %1610 = vmatpush2.bf16.xpose.msra.mxu0 0
    %1611 = vmatprep.subr.bf16.mxu0 0
    %1612 = vmatpush2.bf16.xpose.msra.mxu0 0
    %1613 = vmatprep.subr.bf16.mxu0 0
    %1614 = vmatpush2.bf16.xpose.msra.mxu0 0
    %1615 = vmatprep.subr.bf16.mxu0 0
    %1616 = vmatpush2.bf16.xpose.msra.mxu0 0
    %1617 = vmatprep.subr.bf16.mxu0 0
    %1618 = vmatpush2.bf16.xpose.msra.mxu0 0
    %1619 = vmatprep.subr.bf16.mxu0 0
    %1620 = vmatpush2.bf16.xpose.msra.mxu0 0
    %1621 = vmatprep.subr.bf16.mxu0 0
    %1622 = vmatpush2.bf16.xpose.msra.mxu0 0
    %1623 = vmatprep.subr.bf16.mxu0 0
    %1624 = vmatpush2.bf16.xpose.msra.mxu0 0
    %1625 = vmatprep.mubr.bf16.mxu0 0
    %1626 = vmatmul.mubr.bf16.gmra.mxu0 %v1548
    %v1627 = vpop.f32.mrf.mxu0
    %v1628 = vadd.f32 0.0, %v1627
    %v1629 = vpop.f32.mrf.mxu0
    %v1630 = vpop.f32.mrf.mxu0
    %v1631 = vpop.f32.mrf.mxu0
    %1632 = vdwg.mxu0
    %v1633 = vsel %vm1047, %v1588, -inf
    %1634 = vmax.xlane.f32.xlu0 %v1633
    %v1635 = vpop.xlane.xlu0 %1634
    %v1636 = vsel %vm1047, %v1628, -inf
    %1637 = vmax.xlane.f32.xlu0 %v1636
    %v1638 = vpop.xlane.xlu0 %1637
    %v1639 = vsub.f32 %v1588, %v1635
    %v1640 = vsub.f32 %v1628, %v1638
    %v1641 = vmul.f32 %v1639, 1.442695
    %v1642 = vpow.pop %v1641
    %v1643 = vmul.f32 %v1640, 1.442695
    %v1644 = vpow.pop %v1643
    %v1645 = vsel %vm1047, %v1642, 0.0
    %1646 = vadd.xlane.f32.xlu0 %v1645
    %v1647 = vpop.xlane.xlu0 %1646
    %v1648 = vsel %vm1047, %v1644, 0.0
    %1649 = vadd.xlane.f32.xlu0 %v1648
    %v1650 = vpop.xlane.xlu0 %1649
    %v1651 = vrcp.pop %v1647
    %v1652 = vrcp.pop %v1650
    %v1653 = vpack.c.bf16 %v1642, %v1642
    %v1654 = vpack.c.bf16 %v1644, %v1644
    %v1656 = vsel %vm1047, %v1653, 0
    %v1659 = vsel %vm1073, %v1551, 0
    %1661 = vmatprep.subr.bf16.mxu0 0
    %1662 = vmatpush1.bf16.msra.mxu0 0
    %1663 = vmatprep.subr.bf16.mxu0 0
    %1664 = vmatpush1.bf16.msra.mxu0 0
    %1665 = vmatprep.subr.bf16.mxu0 0
    %1666 = vmatpush1.bf16.msra.mxu0 0
    %1667 = vmatprep.subr.bf16.mxu0 0
    %1668 = vmatpush1.bf16.msra.mxu0 0
    %1669 = vmatprep.subr.bf16.mxu0 0
    %1670 = vmatpush1.bf16.msra.mxu0 0
    %1671 = vmatprep.subr.bf16.mxu0 0
    %1672 = vmatpush1.bf16.msra.mxu0 0
    %1673 = vmatprep.subr.bf16.mxu0 0
    %1674 = vmatpush1.bf16.msra.mxu0 0
    %1675 = vmatprep.subr.bf16.mxu0 0
    %1676 = vmatpush1.bf16.msra.mxu0 %v1659
    %1677 = vmatprep.subr.bf16.mxu0 0
    %1678 = vmatpush2.bf16.msra.mxu0 0
    %1679 = vmatprep.subr.bf16.mxu0 0
    %1680 = vmatpush2.bf16.msra.mxu0 0
    %1681 = vmatprep.subr.bf16.mxu0 0
    %1682 = vmatpush2.bf16.msra.mxu0 0
    %1683 = vmatprep.subr.bf16.mxu0 0
    %1684 = vmatpush2.bf16.msra.mxu0 0
    %1685 = vmatprep.subr.bf16.mxu0 0
    %1686 = vmatpush2.bf16.msra.mxu0 0
    %1687 = vmatprep.subr.bf16.mxu0 0
    %1688 = vmatpush2.bf16.msra.mxu0 0
    %1689 = vmatprep.subr.bf16.mxu0 0
    %1690 = vmatpush2.bf16.msra.mxu0 0
    %1691 = vmatprep.subr.bf16.mxu0 0
    %1692 = vmatpush2.bf16.msra.mxu0 0
    %1693 = vmatprep.mubr.bf16.mxu0 0
    %1694 = vmatmul.mubr.bf16.gmra.mxu0 %v1656
    %v1695 = vpop.f32.mrf.mxu0
    %v1696 = vadd.f32 0.0, %v1695
    %v1697 = vpop.f32.mrf.mxu0
    %v1698 = vpop.f32.mrf.mxu0
    %v1699 = vpop.f32.mrf.mxu0
    %1700 = vdwg.mxu0
    %v1702 = vsel %vm1047, %v1654, 0
    %v1705 = vsel %vm1073, %v1552, 0
    %1707 = vmatprep.subr.bf16.mxu0 0
    %1708 = vmatpush1.bf16.msra.mxu0 0
    %1709 = vmatprep.subr.bf16.mxu0 0
    %1710 = vmatpush1.bf16.msra.mxu0 0
    %1711 = vmatprep.subr.bf16.mxu0 0
    %1712 = vmatpush1.bf16.msra.mxu0 0
    %1713 = vmatprep.subr.bf16.mxu0 0
    %1714 = vmatpush1.bf16.msra.mxu0 0
    %1715 = vmatprep.subr.bf16.mxu0 0
    %1716 = vmatpush1.bf16.msra.mxu0 0
    %1717 = vmatprep.subr.bf16.mxu0 0
    %1718 = vmatpush1.bf16.msra.mxu0 0
    %1719 = vmatprep.subr.bf16.mxu0 0
    %1720 = vmatpush1.bf16.msra.mxu0 0
    %1721 = vmatprep.subr.bf16.mxu0 0
    %1722 = vmatpush1.bf16.msra.mxu0 %v1705
    %1723 = vmatprep.subr.bf16.mxu0 0
    %1724 = vmatpush2.bf16.msra.mxu0 0
    %1725 = vmatprep.subr.bf16.mxu0 0
    %1726 = vmatpush2.bf16.msra.mxu0 0
    %1727 = vmatprep.subr.bf16.mxu0 0
    %1728 = vmatpush2.bf16.msra.mxu0 0
    %1729 = vmatprep.subr.bf16.mxu0 0
    %1730 = vmatpush2.bf16.msra.mxu0 0
    %1731 = vmatprep.subr.bf16.mxu0 0
    %1732 = vmatpush2.bf16.msra.mxu0 0
    %1733 = vmatprep.subr.bf16.mxu0 0
    %1734 = vmatpush2.bf16.msra.mxu0 0
    %1735 = vmatprep.subr.bf16.mxu0 0
    %1736 = vmatpush2.bf16.msra.mxu0 0
    %1737 = vmatprep.subr.bf16.mxu0 0
    %1738 = vmatpush2.bf16.msra.mxu0 0
    %1739 = vmatprep.mubr.bf16.mxu0 0
    %1740 = vmatmul.mubr.bf16.gmra.mxu0 %v1702
    %v1741 = vpop.f32.mrf.mxu0
    %v1742 = vadd.f32 0.0, %v1741
    %v1743 = vpop.f32.mrf.mxu0
    %v1744 = vpop.f32.mrf.mxu0
    %v1745 = vpop.f32.mrf.mxu0
    %1746 = vdwg.mxu0
    %v1747 = vmul.f32 %v1696, %v1651
    %v1748 = vmul.f32 %v1742, %v1652
    %v1749 = vpack.c.bf16 %v1748, %v1747
    %v1766 = vunpack.c.l.b16 %v929
    %v1767 = vunpack.c.l.b16 %v930
    %v1768 = vunpack.c.l.b16 %v931
    %v1769 = vunpack.c.l.b16 %v932
    %v1770 = vunpack.c.l.b16 %v933
    %v1771 = vunpack.c.l.b16 %v934
    %v1772 = vunpack.c.l.b16 %v935
    %v1773 = vunpack.c.l.b16 %v936
    %v1774 = vunpack.c.l.b16 %v937
    %v1775 = vunpack.c.l.b16 %v938
    %v1776 = vunpack.c.l.b16 %v939
    %v1777 = vunpack.c.l.b16 %v940
    %v1778 = vunpack.c.l.b16 %v941
    %v1779 = vunpack.c.l.b16 %v942
    %v1780 = vunpack.c.l.b16 %v943
    %v1781 = vunpack.c.l.b16 %v944
    %v1782 = vpack.c.b16 %v1767, %v1766
    %v1783 = vpack.c.b16 %v1769, %v1768
    %v1784 = vpack.c.b16 %v1771, %v1770
    %v1785 = vpack.c.b16 %v1773, %v1772
    %v1786 = vpack.c.b16 %v1775, %v1774
    %v1787 = vpack.c.b16 %v1777, %v1776
    %v1788 = vpack.c.b16 %v1779, %v1778
    %v1789 = vpack.c.b16 %v1781, %v1780
    %1798 = vmatprep.subr.bf16.mxu0 0
    %1799 = vmatpush1.bf16.msra.mxu0 %v1789
    %1800 = vmatprep.subr.bf16.mxu0 0
    %1801 = vmatpush1.bf16.msra.mxu0 %v1788
    %1802 = vmatprep.subr.bf16.mxu0 0
    %1803 = vmatpush1.bf16.msra.mxu0 %v1787
    %1804 = vmatprep.subr.bf16.mxu0 0
    %1805 = vmatpush1.bf16.msra.mxu0 %v1786
    %1806 = vmatprep.subr.bf16.mxu0 0
    %1807 = vmatpush1.bf16.msra.mxu0 %v1785
    %1808 = vmatprep.subr.bf16.mxu0 0
    %1809 = vmatpush1.bf16.msra.mxu0 %v1784
    %1810 = vmatprep.subr.bf16.mxu0 0
    %1811 = vmatpush1.bf16.msra.mxu0 %v1783
    %1812 = vmatprep.subr.bf16.mxu0 0
    %1813 = vmatpush1.bf16.msra.mxu0 %v1782
    %1814 = vmatprep.subr.bf16.mxu0 0
    %1815 = vmatpush2.bf16.msra.mxu0 0
    %1816 = vmatprep.subr.bf16.mxu0 0
    %1817 = vmatpush2.bf16.msra.mxu0 0
    %1818 = vmatprep.subr.bf16.mxu0 0
    %1819 = vmatpush2.bf16.msra.mxu0 0
    %1820 = vmatprep.subr.bf16.mxu0 0
    %1821 = vmatpush2.bf16.msra.mxu0 0
    %1822 = vmatprep.subr.bf16.mxu0 0
    %1823 = vmatpush2.bf16.msra.mxu0 0
    %1824 = vmatprep.subr.bf16.mxu0 0
    %1825 = vmatpush2.bf16.msra.mxu0 0
    %1826 = vmatprep.subr.bf16.mxu0 0
    %1827 = vmatpush2.bf16.msra.mxu0 0
    %1828 = vmatprep.subr.bf16.mxu0 0
    %1829 = vmatpush2.bf16.msra.mxu0 0
    %1830 = vmatprep.mubr.bf16.mxu0 0
    %1831 = vmatmul.mubr.bf16.gmra.mxu0 %v1749
    %v1832 = vpop.f32.mrf.mxu0
    %v1833 = vadd.f32 0.0, %v1832
    %v1834 = vpop.f32.mrf.mxu0
    %v1835 = vpop.f32.mrf.mxu0
    %v1836 = vadd.f32 0.0, %v1835
    %v1837 = vpop.f32.mrf.mxu0
    %1838 = vdwg.mxu0
    %v1839 = vadd.f32 %v1541, %v1833
    %v1840 = vadd.f32 %v1544, %v1836
    %v1841 = vpack.c.bf16 %v719, %v719
    %v1842 = vpack.c.bf16 %v723, %v723
    %v1843 = vpack.c.bf16 %v805, %v805
    %v1844 = vpack.c.bf16 %v809, %v809
    %v1845 = vpack.c.bf16 %v891, %v891
    %v1846 = vpack.c.bf16 %v895, %v895
    %1847 = vmatprep.subr.bf16.mxu0 0
    %1848 = vmatpush1.bf16.xpose.msra.mxu0 0
    %1849 = vmatprep.subr.bf16.mxu0 0
    %1850 = vmatpush1.bf16.xpose.msra.mxu0 0
    %1851 = vmatprep.subr.bf16.mxu0 0
    %1852 = vmatpush1.bf16.xpose.msra.mxu0 0
    %1853 = vmatprep.subr.bf16.mxu0 0
    %1854 = vmatpush1.bf16.xpose.msra.mxu0 0
    %1855 = vmatprep.subr.bf16.mxu0 0
    %1856 = vmatpush1.bf16.xpose.msra.mxu0 0
    %1857 = vmatprep.subr.bf16.mxu0 0
    %1858 = vmatpush1.bf16.xpose.msra.mxu0 0
    %1859 = vmatprep.subr.bf16.mxu0 0
    %1860 = vmatpush1.bf16.xpose.msra.mxu0 0
    %1861 = vmatprep.subr.bf16.mxu0 0
    %1862 = vmatpush1.bf16.xpose.msra.mxu0 %v1843
    %1863 = vmatprep.subr.bf16.mxu0 0
    %1864 = vmatpush2.bf16.xpose.msra.mxu0 0
    %1865 = vmatprep.subr.bf16.mxu0 0
    %1866 = vmatpush2.bf16.xpose.msra.mxu0 0
    %1867 = vmatprep.subr.bf16.mxu0 0
    %1868 = vmatpush2.bf16.xpose.msra.mxu0 0
    %1869 = vmatprep.subr.bf16.mxu0 0
    %1870 = vmatpush2.bf16.xpose.msra.mxu0 0
    %1871 = vmatprep.subr.bf16.mxu0 0
    %1872 = vmatpush2.bf16.xpose.msra.mxu0 0
    %1873 = vmatprep.subr.bf16.mxu0 0
    %1874 = vmatpush2.bf16.xpose.msra.mxu0 0
    %1875 = vmatprep.subr.bf16.mxu0 0
    %1876 = vmatpush2.bf16.xpose.msra.mxu0 0
    %1877 = vmatprep.subr.bf16.mxu0 0
    %1878 = vmatpush2.bf16.xpose.msra.mxu0 0
    %1879 = vmatprep.mubr.bf16.mxu0 0
    %1880 = vmatmul.mubr.bf16.gmra.mxu0 %v1841
    %v1881 = vpop.f32.mrf.mxu0
    %v1882 = vadd.f32 0.0, %v1881
    %v1883 = vpop.f32.mrf.mxu0
    %v1884 = vpop.f32.mrf.mxu0
    %v1885 = vpop.f32.mrf.mxu0
    %1886 = vdwg.mxu0
    %1887 = vmatprep.subr.bf16.mxu0 0
    %1888 = vmatpush1.bf16.xpose.msra.mxu0 0
    %1889 = vmatprep.subr.bf16.mxu0 0
    %1890 = vmatpush1.bf16.xpose.msra.mxu0 0
    %1891 = vmatprep.subr.bf16.mxu0 0
    %1892 = vmatpush1.bf16.xpose.msra.mxu0 0
    %1893 = vmatprep.subr.bf16.mxu0 0
    %1894 = vmatpush1.bf16.xpose.msra.mxu0 0
    %1895 = vmatprep.subr.bf16.mxu0 0
    %1896 = vmatpush1.bf16.xpose.msra.mxu0 0
    %1897 = vmatprep.subr.bf16.mxu0 0
    %1898 = vmatpush1.bf16.xpose.msra.mxu0 0
    %1899 = vmatprep.subr.bf16.mxu0 0
    %1900 = vmatpush1.bf16.xpose.msra.mxu0 0
    %1901 = vmatprep.subr.bf16.mxu0 0
    %1902 = vmatpush1.bf16.xpose.msra.mxu0 %v1844
    %1903 = vmatprep.subr.bf16.mxu0 0
    %1904 = vmatpush2.bf16.xpose.msra.mxu0 0
    %1905 = vmatprep.subr.bf16.mxu0 0
    %1906 = vmatpush2.bf16.xpose.msra.mxu0 0
    %1907 = vmatprep.subr.bf16.mxu0 0
    %1908 = vmatpush2.bf16.xpose.msra.mxu0 0
    %1909 = vmatprep.subr.bf16.mxu0 0
    %1910 = vmatpush2.bf16.xpose.msra.mxu0 0
    %1911 = vmatprep.subr.bf16.mxu0 0
    %1912 = vmatpush2.bf16.xpose.msra.mxu0 0
    %1913 = vmatprep.subr.bf16.mxu0 0
    %1914 = vmatpush2.bf16.xpose.msra.mxu0 0
    %1915 = vmatprep.subr.bf16.mxu0 0
    %1916 = vmatpush2.bf16.xpose.msra.mxu0 0
    %1917 = vmatprep.subr.bf16.mxu0 0
    %1918 = vmatpush2.bf16.xpose.msra.mxu0 0
    %1919 = vmatprep.mubr.bf16.mxu0 0
    %1920 = vmatmul.mubr.bf16.gmra.mxu0 %v1842
    %v1921 = vpop.f32.mrf.mxu0
    %v1922 = vadd.f32 0.0, %v1921
    %v1923 = vpop.f32.mrf.mxu0
    %v1924 = vpop.f32.mrf.mxu0
    %v1925 = vpop.f32.mrf.mxu0
    %1926 = vdwg.mxu0
    %v1927 = vsel %vm1047, %v1882, -inf
    %1928 = vmax.xlane.f32.xlu0 %v1927
    %v1929 = vpop.xlane.xlu0 %1928
    %v1930 = vsel %vm1047, %v1922, -inf
    %1931 = vmax.xlane.f32.xlu0 %v1930
    %v1932 = vpop.xlane.xlu0 %1931
    %v1933 = vsub.f32 %v1882, %v1929
    %v1934 = vsub.f32 %v1922, %v1932
    %v1935 = vmul.f32 %v1933, 1.442695
    %v1936 = vpow.pop %v1935
    %v1937 = vmul.f32 %v1934, 1.442695
    %v1938 = vpow.pop %v1937
    %v1939 = vsel %vm1047, %v1936, 0.0
    %1940 = vadd.xlane.f32.xlu0 %v1939
    %v1941 = vpop.xlane.xlu0 %1940
    %v1942 = vsel %vm1047, %v1938, 0.0
    %1943 = vadd.xlane.f32.xlu0 %v1942
    %v1944 = vpop.xlane.xlu0 %1943
    %v1945 = vrcp.pop %v1941
    %v1946 = vrcp.pop %v1944
    %v1947 = vpack.c.bf16 %v1936, %v1936
    %v1948 = vpack.c.bf16 %v1938, %v1938
    %v1950 = vsel %vm1047, %v1947, 0
    %v1953 = vsel %vm1073, %v1845, 0
    %1955 = vmatprep.subr.bf16.mxu0 0
    %1956 = vmatpush1.bf16.msra.mxu0 0
    %1957 = vmatprep.subr.bf16.mxu0 0
    %1958 = vmatpush1.bf16.msra.mxu0 0
    %1959 = vmatprep.subr.bf16.mxu0 0
    %1960 = vmatpush1.bf16.msra.mxu0 0
    %1961 = vmatprep.subr.bf16.mxu0 0
    %1962 = vmatpush1.bf16.msra.mxu0 0
    %1963 = vmatprep.subr.bf16.mxu0 0
    %1964 = vmatpush1.bf16.msra.mxu0 0
    %1965 = vmatprep.subr.bf16.mxu0 0
    %1966 = vmatpush1.bf16.msra.mxu0 0
    %1967 = vmatprep.subr.bf16.mxu0 0
    %1968 = vmatpush1.bf16.msra.mxu0 0
    %1969 = vmatprep.subr.bf16.mxu0 0
    %1970 = vmatpush1.bf16.msra.mxu0 %v1953
    %1971 = vmatprep.subr.bf16.mxu0 0
    %1972 = vmatpush2.bf16.msra.mxu0 0
    %1973 = vmatprep.subr.bf16.mxu0 0
    %1974 = vmatpush2.bf16.msra.mxu0 0
    %1975 = vmatprep.subr.bf16.mxu0 0
    %1976 = vmatpush2.bf16.msra.mxu0 0
    %1977 = vmatprep.subr.bf16.mxu0 0
    %1978 = vmatpush2.bf16.msra.mxu0 0
    %1979 = vmatprep.subr.bf16.mxu0 0
    %1980 = vmatpush2.bf16.msra.mxu0 0
    %1981 = vmatprep.subr.bf16.mxu0 0
    %1982 = vmatpush2.bf16.msra.mxu0 0
    %1983 = vmatprep.subr.bf16.mxu0 0
    %1984 = vmatpush2.bf16.msra.mxu0 0
    %1985 = vmatprep.subr.bf16.mxu0 0
    %1986 = vmatpush2.bf16.msra.mxu0 0
    %1987 = vmatprep.mubr.bf16.mxu0 0
    %1988 = vmatmul.mubr.bf16.gmra.mxu0 %v1950
    %v1989 = vpop.f32.mrf.mxu0
    %v1990 = vadd.f32 0.0, %v1989
    %v1991 = vpop.f32.mrf.mxu0
    %v1992 = vpop.f32.mrf.mxu0
    %v1993 = vpop.f32.mrf.mxu0
    %1994 = vdwg.mxu0
    %v1996 = vsel %vm1047, %v1948, 0
    %v1999 = vsel %vm1073, %v1846, 0
    %2001 = vmatprep.subr.bf16.mxu0 0
    %2002 = vmatpush1.bf16.msra.mxu0 0
    %2003 = vmatprep.subr.bf16.mxu0 0
    %2004 = vmatpush1.bf16.msra.mxu0 0
    %2005 = vmatprep.subr.bf16.mxu0 0
    %2006 = vmatpush1.bf16.msra.mxu0 0
    %2007 = vmatprep.subr.bf16.mxu0 0
    %2008 = vmatpush1.bf16.msra.mxu0 0
    %2009 = vmatprep.subr.bf16.mxu0 0
    %2010 = vmatpush1.bf16.msra.mxu0 0
    %2011 = vmatprep.subr.bf16.mxu0 0
    %2012 = vmatpush1.bf16.msra.mxu0 0
    %2013 = vmatprep.subr.bf16.mxu0 0
    %2014 = vmatpush1.bf16.msra.mxu0 0
    %2015 = vmatprep.subr.bf16.mxu0 0
    %2016 = vmatpush1.bf16.msra.mxu0 %v1999
    %2017 = vmatprep.subr.bf16.mxu0 0
    %2018 = vmatpush2.bf16.msra.mxu0 0
    %2019 = vmatprep.subr.bf16.mxu0 0
    %2020 = vmatpush2.bf16.msra.mxu0 0
    %2021 = vmatprep.subr.bf16.mxu0 0
    %2022 = vmatpush2.bf16.msra.mxu0 0
    %2023 = vmatprep.subr.bf16.mxu0 0
    %2024 = vmatpush2.bf16.msra.mxu0 0
    %2025 = vmatprep.subr.bf16.mxu0 0
    %2026 = vmatpush2.bf16.msra.mxu0 0
    %2027 = vmatprep.subr.bf16.mxu0 0
    %2028 = vmatpush2.bf16.msra.mxu0 0
    %2029 = vmatprep.subr.bf16.mxu0 0
    %2030 = vmatpush2.bf16.msra.mxu0 0
    %2031 = vmatprep.subr.bf16.mxu0 0
    %2032 = vmatpush2.bf16.msra.mxu0 0
    %2033 = vmatprep.mubr.bf16.mxu0 0
    %2034 = vmatmul.mubr.bf16.gmra.mxu0 %v1996
    %v2035 = vpop.f32.mrf.mxu0
    %v2036 = vadd.f32 0.0, %v2035
    %v2037 = vpop.f32.mrf.mxu0
    %v2038 = vpop.f32.mrf.mxu0
    %v2039 = vpop.f32.mrf.mxu0
    %2040 = vdwg.mxu0
    %v2041 = vmul.f32 %v1990, %v1945
    %v2042 = vmul.f32 %v2036, %v1946
    %v2043 = vpack.c.bf16 %v2042, %v2041
    %v2060 = vunpack.c.l.b16 %v945
    %v2061 = vunpack.c.l.b16 %v946
    %v2062 = vunpack.c.l.b16 %v947
    %v2063 = vunpack.c.l.b16 %v948
    %v2064 = vunpack.c.l.b16 %v949
    %v2065 = vunpack.c.l.b16 %v950
    %v2066 = vunpack.c.l.b16 %v951
    %v2067 = vunpack.c.l.b16 %v952
    %v2068 = vunpack.c.l.b16 %v953
    %v2069 = vunpack.c.l.b16 %v954
    %v2070 = vunpack.c.l.b16 %v955
    %v2071 = vunpack.c.l.b16 %v956
    %v2072 = vunpack.c.l.b16 %v957
    %v2073 = vunpack.c.l.b16 %v958
    %v2074 = vunpack.c.l.b16 %v959
    %v2075 = vunpack.c.l.b16 %v960
    %v2076 = vpack.c.b16 %v2061, %v2060
    %v2077 = vpack.c.b16 %v2063, %v2062
    %v2078 = vpack.c.b16 %v2065, %v2064
    %v2079 = vpack.c.b16 %v2067, %v2066
    %v2080 = vpack.c.b16 %v2069, %v2068
    %v2081 = vpack.c.b16 %v2071, %v2070
    %v2082 = vpack.c.b16 %v2073, %v2072
    %v2083 = vpack.c.b16 %v2075, %v2074
    %2092 = vmatprep.subr.bf16.mxu0 0
    %2093 = vmatpush1.bf16.msra.mxu0 %v2083
    %2094 = vmatprep.subr.bf16.mxu0 0
    %2095 = vmatpush1.bf16.msra.mxu0 %v2082
    %2096 = vmatprep.subr.bf16.mxu0 0
    %2097 = vmatpush1.bf16.msra.mxu0 %v2081
    %2098 = vmatprep.subr.bf16.mxu0 0
    %2099 = vmatpush1.bf16.msra.mxu0 %v2080
    %2100 = vmatprep.subr.bf16.mxu0 0
    %2101 = vmatpush1.bf16.msra.mxu0 %v2079
    %2102 = vmatprep.subr.bf16.mxu0 0
    %2103 = vmatpush1.bf16.msra.mxu0 %v2078
    %2104 = vmatprep.subr.bf16.mxu0 0
    %2105 = vmatpush1.bf16.msra.mxu0 %v2077
    %2106 = vmatprep.subr.bf16.mxu0 0
    %2107 = vmatpush1.bf16.msra.mxu0 %v2076
    %2108 = vmatprep.subr.bf16.mxu0 0
    %2109 = vmatpush2.bf16.msra.mxu0 0
    %2110 = vmatprep.subr.bf16.mxu0 0
    %2111 = vmatpush2.bf16.msra.mxu0 0
    %2112 = vmatprep.subr.bf16.mxu0 0
    %2113 = vmatpush2.bf16.msra.mxu0 0
    %2114 = vmatprep.subr.bf16.mxu0 0
    %2115 = vmatpush2.bf16.msra.mxu0 0
    %2116 = vmatprep.subr.bf16.mxu0 0
    %2117 = vmatpush2.bf16.msra.mxu0 0
    %2118 = vmatprep.subr.bf16.mxu0 0
    %2119 = vmatpush2.bf16.msra.mxu0 0
    %2120 = vmatprep.subr.bf16.mxu0 0
    %2121 = vmatpush2.bf16.msra.mxu0 0
    %2122 = vmatprep.subr.bf16.mxu0 0
    %2123 = vmatpush2.bf16.msra.mxu0 0
    %2124 = vmatprep.mubr.bf16.mxu0 0
    %2125 = vmatmul.mubr.bf16.gmra.mxu0 %v2043
    %v2126 = vpop.f32.mrf.mxu0
    %v2127 = vadd.f32 0.0, %v2126
    %v2128 = vpop.f32.mrf.mxu0
    %v2129 = vpop.f32.mrf.mxu0
    %v2130 = vadd.f32 0.0, %v2129
    %v2131 = vpop.f32.mrf.mxu0
    %2132 = vdwg.mxu0
    %v2133 = vadd.f32 %v1839, %v2127
    %v2134 = vadd.f32 %v1840, %v2130
    %v2135 = vld [vmem:[%s3] sm:$0x1]
    %v2137 = vlaneseq
    %v2138 = vshrl.u32 %v2137, 7
    %v2139 = vsub.s32 0, %v2138
    %v2140 = vrot.slane %v2135, %v2139
    %v2142 = vadd.f32 %v2133, %v2140
    %v2143 = vadd.f32 %v2134, %v2140
    %2144 = vst [vmem:[#allocation8] sm:$0xff] %v2142
    %2145 = vst [vmem:[#allocation8 + $0x8] sm:$0xff] %v2143
    // Predicated region
    $region30: #{tpu_custom_call.1} parent=1 // pred_check
      _
    $region31: #{tpu_custom_call.1} parent=1 // pred_check_branch
      %2147 = sbr.rel (0) target = $region33
    $region32: #{tpu_custom_call.1} parent=1 // pred_region
      %s2149 = ssub.s32 256, 256
      %2150 = vsyncadd [#allocation4], %s2149
      %s2151 = sshll.u32 [#allocation8], 4
      %s2152 = int_to_ptr.vmem [resolvable:$true] %s2151
      %2157 = dma.vmem_to_hbm [thread:$0]  %s2152, 256, %s4, [#allocation4], 128, 128, 8
    $region33: #{tpu_custom_call.1} parent=1 // pred_fallthru
      _
    // Predicated region
    $region34: #{tpu_custom_call.1} parent=1 // pred_check
      _
    $region35: #{tpu_custom_call.1} parent=1 // pred_check_branch
      %2159 = sbr.rel (0) target = $region37
    $region36: #{tpu_custom_call.1} parent=1 // pred_region
      %2160 = dma.done [#allocation4], 256
    $region37: #{tpu_custom_call.1} parent=1 // pred_fallthru
      _
    %2161 = vsyncpa [#allocation3], 1
    %2162 = vsyncpa [#allocation6], 1
    %2163 = vsyncpa [#allocation4], 1

</llo_original>
